<compile_context>
chip_gen: v7x
topology: tpu7x:2x2x1
jax: 0.10.0
libtpu: 0.0.40
codegen_flags: <defaults>
</compile_context>

<pallas_src>
import jax
import jax.numpy as jnp
from jax.experimental import pallas as pl
from jax.experimental.pallas import tpu as pltpu

LOGIT_SCALE = 1.0 / 0.07  # CLIP-style fixed temperature


# ---------------------------------------------------------------------------
# helpers
# ---------------------------------------------------------------------------
def _round_up(n, m):
    return ((n + m - 1) // m) * m


def _pad_to(x, shape):
    pads = [(0, s - d) for d, s in zip(x.shape, shape)]
    return jnp.pad(x, pads)


def _bytes(*arrs):
    return int(sum(int(a.size) * a.dtype.itemsize for a in arrs))


# ---------------------------------------------------------------------------
# Kernel A: image-only path  (prompter + backbone.encode_image)
# grid = (n_k,) over the CHW reduction; f32 accumulator in VMEM.
# ---------------------------------------------------------------------------
def _encode_image_kernel(x_ref, p_ref, w_img_ref, b_img_ref, feat_ref, acc_ref):
    k = pl.program_id(0)

    @pl.when(k == 0)
    def _():
        acc_ref[...] = jnp.zeros_like(acc_ref)

    prompted = x_ref[...] + p_ref[...]                              # bf16 (B, tk)
    acc_ref[...] += jnp.dot(prompted, w_img_ref[...],
                            preferred_element_type=jnp.float32)

    @pl.when(k == pl.num_programs(0) - 1)
    def _():
        feat_ref[...] = acc_ref[...] + b_img_ref[...]


# ---------------------------------------------------------------------------
# Kernel B: fused full forward (prompter + backbone + text_encoder + projector)
# Image feats stay resident in a VMEM scratch; text/projector stage runs under
# pl.when on the last K step.
# ---------------------------------------------------------------------------
def _fused_forward_kernel(x_ref, p_ref, w_img_ref, b_img_ref,
                          txt_ref, w_txt_ref, b_txt_ref, w_prj_ref, b_prj_ref,
                          proj_ref, logits_ref, acc_ref):
    k = pl.program_id(0)

    @pl.when(k == 0)
    def _():
        acc_ref[...] = jnp.zeros_like(acc_ref)

    # prompter + backbone partial matmul over this K tile
    prompted = x_ref[...] + p_ref[...]                              # bf16 (B, tk)
    acc_ref[...] += jnp.dot(prompted, w_img_ref[...],
                            preferred_element_type=jnp.float32)

    @pl.when(k == pl.num_programs(0) - 1)
    def _():
        img_feats = acc_ref[...] + b_img_ref[...]                   # f32 (B, D)

        # text encoder: mean over templates first (affine map commutes with mean)
        txt_mean = jnp.mean(txt_ref[...].astype(jnp.float32), axis=1)  # (B, E)
        text_feats = jnp.dot(txt_mean.astype(jnp.bfloat16), w_txt_ref[...],
                             preferred_element_type=jnp.float32) + b_txt_ref[...]
        # TODO(synk): PyTorch version print()s the text-feature shape (host-side); skipped.

        # projector head -> proj
        proj_ref[...] = jnp.dot(img_feats.astype(jnp.bfloat16), w_prj_ref[...],
                                preferred_element_type=jnp.float32) + b_prj_ref[...]

        # projector head -> logits (cosine similarity, CLIP-style),
        # contracting the last axis of both operands (no transpose materialized).
        img_n = img_feats * jax.lax.rsqrt(
            jnp.sum(img_feats * img_feats, axis=-1, keepdims=True) + 1e-12)
        txt_n = text_feats * jax.lax.rsqrt(
            jnp.sum(text_feats * text_feats, axis=-1, keepdims=True) + 1e-12)
        logits_ref[...] = LOGIT_SCALE * jax.lax.dot_general(
            img_n.astype(jnp.bfloat16), txt_n.astype(jnp.bfloat16),
            dimension_numbers=(((1,), (1,)), ((), ())),
            preferred_element_type=jnp.float32)                     # (B, B)


# ---------------------------------------------------------------------------
# Wrapper: padding, BlockSpecs, pallas_call plumbing
# ---------------------------------------------------------------------------
_COMPILER_PARAMS = pltpu.CompilerParams(
    dimension_semantics=("arbitrary",),        # K axis is a reduction
    vmem_limit_bytes=32 * 1024 * 1024,         # safe on v5e / v6e / v7x
)


def spt_forward(images, params, text_prompts=None, *, tk_target=512):
    B, C, H, W = images.shape
    CHW = C * H * W
    D = params["w_img"].shape[1]

    # pad batch to sublane multiple, features to lane multiples
    B_pad = _round_up(B, 8)
    D_pad = _round_up(D, 128)
    tk = min(tk_target, _round_up(CHW, 128))
    CHW_pad = _round_up(CHW, tk)
    n_k = CHW_pad // tk

    # bf16 operands for the MXU (f32 accumulation inside the kernel),
    # f32 biases / outputs.
    x = _pad_to(images.reshape(B, CHW), (B_pad, CHW_pad)).astype(jnp.bfloat16)
    prompt = _pad_to(params["prompt"].reshape(1, CHW), (1, CHW_pad)).astype(jnp.bfloat16)
    w_img = _pad_to(params["w_img"], (CHW_pad, D_pad)).astype(jnp.bfloat16)
    b_img = _pad_to(params["b_img"], (1, D_pad)).astype(jnp.float32)

    img_in_specs = [
        pl.BlockSpec((B_pad, tk), lambda k: (0, k)),
        pl.BlockSpec((1, tk), lambda k: (0, k)),
        pl.BlockSpec((tk, D_pad), lambda k: (k, 0)),
        pl.BlockSpec((1, D_pad), lambda k: (0, 0)),
    ]

    if text_prompts is None:
        feats = pl.pallas_call(
            _encode_image_kernel,
            out_shape=jax.ShapeDtypeStruct((B_pad, D_pad), jnp.float32),
            grid=(n_k,),
            in_specs=img_in_specs,
            out_specs=pl.BlockSpec((B_pad, D_pad), lambda k: (0, 0)),
            scratch_shapes=[pltpu.VMEM((B_pad, D_pad), jnp.float32)],
            compiler_params=_COMPILER_PARAMS,
            cost_estimate=pl.CostEstimate(
                flops=2 * B_pad * CHW_pad * D_pad,
                transcendentals=0,
                bytes_accessed=_bytes(x, prompt, w_img, b_img) + B_pad * D_pad * 4,
            ),
        )(x, prompt, w_img, b_img)
        return feats[:B, :D]

    Bt, T, E = text_prompts.shape
    assert Bt == B
    P = params["w_proj"].shape[1]
    E_pad = _round_up(E, 128)
    P_pad = _round_up(P, 128)

    txt = _pad_to(text_prompts, (B_pad, T, E_pad)).astype(jnp.bfloat16)
    w_text = _pad_to(params["w_text"], (E_pad, D_pad)).astype(jnp.bfloat16)
    b_text = _pad_to(params["b_text"], (1, D_pad)).astype(jnp.float32)
    w_proj = _pad_to(params["w_proj"], (D_pad, P_pad)).astype(jnp.bfloat16)
    b_proj = _pad_to(params["b_proj"], (1, P_pad)).astype(jnp.float32)

    flops = (2 * B_pad * CHW_pad * D_pad       # image encoder
             + 2 * B_pad * E_pad * D_pad       # text encoder
             + 2 * B_pad * D_pad * P_pad       # projection head
             + 2 * B_pad * D_pad * B_pad)      # cosine-sim logits

    proj, logits = pl.pallas_call(
        _fused_forward_kernel,
        out_shape=(jax.ShapeDtypeStruct((B_pad, P_pad), jnp.float32),
                   jax.ShapeDtypeStruct((B_pad, B_pad), jnp.float32)),
        grid=(n_k,),
        in_specs=img_in_specs + [
            pl.BlockSpec((B_pad, T, E_pad), lambda k: (0, 0, 0)),
            pl.BlockSpec((E_pad, D_pad), lambda k: (0, 0)),
            pl.BlockSpec((1, D_pad), lambda k: (0, 0)),
            pl.BlockSpec((D_pad, P_pad), lambda k: (0, 0)),
            pl.BlockSpec((1, P_pad), lambda k: (0, 0)),
        ],
        out_specs=(pl.BlockSpec((B_pad, P_pad), lambda k: (0, 0)),
                   pl.BlockSpec((B_pad, B_pad), lambda k: (0, 0))),
        scratch_shapes=[pltpu.VMEM((B_pad, D_pad), jnp.float32)],
        compiler_params=_COMPILER_PARAMS,
        cost_estimate=pl.CostEstimate(
            flops=flops,
            transcendentals=2 * B_pad,
            bytes_accessed=_bytes(x, prompt, w_img, b_img, txt, w_text, b_text,
                                  w_proj, b_proj) + 4 * (B_pad * P_pad + B_pad * B_pad),
        ),
    )(x, prompt, w_img, b_img, txt, w_text, b_text, w_proj, b_proj)

    return proj[:B, :P], logits[:B, :B]


# ---------------------------------------------------------------------------
# Deterministic parameter init (synthetic linear sub-modules)
# ---------------------------------------------------------------------------
def init_params(key, C=4, H=16, W=16, D=32, E=64, P=16):
    ks = jax.random.split(key, 4)
    s = 0.02
    return dict(
        prompt=s * jax.random.normal(ks[0], (1, C, H, W), jnp.float32),
        w_img=s * jax.random.normal(ks[1], (C * H * W, D), jnp.float32),
        b_img=jnp.zeros((1, D), jnp.float32),
        w_text=s * jax.random.normal(ks[2], (E, D), jnp.float32),
        b_text=jnp.zeros((1, D), jnp.float32),
        w_proj=s * jax.random.normal(ks[3], (D, P), jnp.float32),
        b_proj=jnp.zeros((1, P), jnp.float32),
    )


# ---------------------------------------------------------------------------
# Pure-JAX reference (f32) for a loose sanity check
# ---------------------------------------------------------------------------
def _reference(images, params, text_prompts):
    B, C, H, W = images.shape
    x = images.reshape(B, -1) + params["prompt"].reshape(1, -1)
    img_feats = x @ params["w_img"] + params["b_img"]
    txt = text_prompts.reshape(-1, text_prompts.shape[-1])
    tfeat = (txt @ params["w_text"] + params["b_text"]).reshape(
        B, text_prompts.shape[1], -1).mean(axis=1)
    proj = img_feats @ params["w_proj"] + params["b_proj"]
    img_n = img_feats / jnp.linalg.norm(img_feats, axis=-1, keepdims=True)
    txt_n = tfeat / jnp.linalg.norm(tfeat, axis=-1, keepdims=True)
    logits = LOGIT_SCALE * img_n @ txt_n.T
    return img_feats, proj, logits


if __name__ == "__main__":
    key = jax.random.PRNGKey(0)
    k_img, k_txt, k_par = jax.random.split(key, 3)

    B, C, H, W = 2, 4, 16, 16      # images: NCHW
    T, E = 4, 64                   # 4 text templates, embed dim 64

    images = jax.random.normal(k_img, (B, C, H, W), jnp.float32)
    text_prompts = jax.random.normal(k_txt, (B, T, E), jnp.float32)
    params = init_params(k_par, C=C, H=H, W=W, D=32, E=E, P=16)

    # text path (returns (proj, logits)) -- single fused kernel
    proj, logits = spt_forward(images, params, text_prompts)
    jax.block_until_ready((proj, logits))

    # image-only path (returns image_feats)
    feats = spt_forward(images, params, None)
    jax.block_until_ready(feats)

    assert proj.shape == (B, 16) and logits.shape == (B, B) and feats.shape == (B, 32)
    assert jnp.all(jnp.isfinite(proj)) and jnp.all(jnp.isfinite(logits))

    # loose numerical sanity check (bf16 MXU operands vs f32 reference)
    ref_feats, ref_proj, ref_logits = _reference(images, params, text_prompts)
    assert jnp.allclose(feats, ref_feats, atol=0.05, rtol=0.05)
    assert jnp.allclose(proj, ref_proj, atol=0.05, rtol=0.05)
    assert jnp.allclose(logits, ref_logits, atol=0.5, rtol=0.05)

    print("KERNEL_OK")
</pallas_src>

<mosaic_0001>
module attributes {stable_mosaic.version = 11 : i64} {
  func.func @_fused_forward_kernel(%arg0: i32, %arg1: memref<8x512xbf16, #tpu.memory_space<vmem>>, %arg2: memref<1x512xbf16, #tpu.memory_space<vmem>>, %arg3: memref<512x128xbf16, #tpu.memory_space<vmem>>, %arg4: memref<1x128xf32, #tpu.memory_space<vmem>>, %arg5: memref<8x4x128xbf16, #tpu.memory_space<vmem>>, %arg6: memref<128x128xbf16, #tpu.memory_space<vmem>>, %arg7: memref<1x128xf32, #tpu.memory_space<vmem>>, %arg8: memref<128x128xbf16, #tpu.memory_space<vmem>>, %arg9: memref<1x128xf32, #tpu.memory_space<vmem>>, %arg10: memref<8x128xf32, #tpu.memory_space<vmem>>, %arg11: memref<8x8xf32, #tpu.memory_space<vmem>>, %arg12: memref<8x128xf32, #tpu.memory_space<vmem>>) attributes {dimension_semantics = [#tpu.dimension_semantics<arbitrary>], iteration_bounds = array<i64: 2>, scalar_prefetch = 0 : i64, scratch_operands = 1 : i64, tpu.core_type = #tpu.core_type<tc>, window_params = [{transform_indices = @transform_0, window_bounds = array<i64: 8, 512>}, {transform_indices = @transform_1, window_bounds = array<i64: 1, 512>}, {transform_indices = @transform_2, window_bounds = array<i64: 512, 128>}, {pipeline_mode = #tpu.pipeline_mode<synchronous>, transform_indices = @transform_3, window_bounds = array<i64: 1, 128>}, {pipeline_mode = #tpu.pipeline_mode<synchronous>, transform_indices = @transform_4, window_bounds = array<i64: 8, 4, 128>}, {pipeline_mode = #tpu.pipeline_mode<synchronous>, transform_indices = @transform_5, window_bounds = array<i64: 128, 128>}, {pipeline_mode = #tpu.pipeline_mode<synchronous>, transform_indices = @transform_6, window_bounds = array<i64: 1, 128>}, {pipeline_mode = #tpu.pipeline_mode<synchronous>, transform_indices = @transform_7, window_bounds = array<i64: 128, 128>}, {pipeline_mode = #tpu.pipeline_mode<synchronous>, transform_indices = @transform_8, window_bounds = array<i64: 1, 128>}, {pipeline_mode = #tpu.pipeline_mode<synchronous>, transform_indices = @transform_9, window_bounds = array<i64: 8, 128>}, {pipeline_mode = #tpu.pipeline_mode<synchronous>, transform_indices = @transform_10, window_bounds = array<i64: 8, 8>}]} {
    %c0_i32 = arith.constant 0 : i32
    %0 = arith.cmpi eq, %arg0, %c0_i32 : i32
    %1 = arith.extui %0 : i1 to i32
    %c0_i32_0 = arith.constant 0 : i32
    %2 = arith.cmpi ne, %1, %c0_i32_0 : i32
    scf.if %2 {
      %cst_11 = arith.constant 0.000000e+00 : f32
      %15 = vector.broadcast %cst_11 : f32 to vector<8x128xf32>
      %c0_12 = arith.constant 0 : index
      %c0_13 = arith.constant 0 : index
      %16 = vector.load %arg12[%c0_12, %c0_13] : memref<8x128xf32, #tpu.memory_space<vmem>>, vector<8x128xf32>
      tpu.vector_store %arg12[%c0_12, %c0_13], %15 {strides = array<i32>} : memref<8x128xf32, #tpu.memory_space<vmem>>, vector<8x128xf32>,
    } else {
    }
    %c0 = arith.constant 0 : index
    %c0_1 = arith.constant 0 : index
    %3 = vector.load %arg1[%c0, %c0_1] : memref<8x512xbf16, #tpu.memory_space<vmem>>, vector<8x512xbf16>
    %c0_2 = arith.constant 0 : index
    %c0_3 = arith.constant 0 : index
    %4 = vector.load %arg2[%c0_2, %c0_3] : memref<1x512xbf16, #tpu.memory_space<vmem>>, vector<1x512xbf16>
    %5 = vector.broadcast %4 : vector<1x512xbf16> to vector<8x512xbf16>
    %6 = arith.addf %3, %5 : vector<8x512xbf16>
    %c0_4 = arith.constant 0 : index
    %c0_5 = arith.constant 0 : index
    %7 = vector.load %arg12[%c0_4, %c0_5] : memref<8x128xf32, #tpu.memory_space<vmem>>, vector<8x128xf32>
    %c0_6 = arith.constant 0 : index
    %c0_7 = arith.constant 0 : index
    %8 = vector.load %arg3[%c0_6, %c0_7] : memref<512x128xbf16, #tpu.memory_space<vmem>>, vector<512x128xbf16>
    %cst = arith.constant dense<0.000000e+00> : vector<8x128xf32>
    %9 = tpu.matmul %6, %8, %cst {dimension_numbers = #tpu.dot_dimension_numbers<[1], [0], [0], [1], [0, 0, 1, 1], [], []>} : vector<8x512xbf16>, vector<512x128xbf16>, vector<8x128xf32> -> vector<8x128xf32>
    %10 = arith.addf %7, %9 : vector<8x128xf32>
    %c0_8 = arith.constant 0 : index
    %c0_9 = arith.constant 0 : index
    %11 = vector.load %arg12[%c0_8, %c0_9] : memref<8x128xf32, #tpu.memory_space<vmem>>, vector<8x128xf32>
    tpu.vector_store %arg12[%c0_8, %c0_9], %10 {strides = array<i32>} : memref<8x128xf32, #tpu.memory_space<vmem>>, vector<8x128xf32>,
    %c1_i32 = arith.constant 1 : i32
    %12 = arith.cmpi eq, %arg0, %c1_i32 : i32
    %13 = arith.extui %12 : i1 to i32
    %c0_i32_10 = arith.constant 0 : i32
    %14 = arith.cmpi ne, %13, %c0_i32_10 : i32
    scf.if %14 {
      %c0_11 = arith.constant 0 : index
      %c0_12 = arith.constant 0 : index
      %15 = vector.load %arg12[%c0_11, %c0_12] : memref<8x128xf32, #tpu.memory_space<vmem>>, vector<8x128xf32>
      %c0_13 = arith.constant 0 : index
      %c0_14 = arith.constant 0 : index
      %16 = vector.load %arg4[%c0_13, %c0_14] : memref<1x128xf32, #tpu.memory_space<vmem>>, vector<1x128xf32>
      %17 = vector.broadcast %16 : vector<1x128xf32> to vector<8x128xf32>
      %18 = arith.addf %15, %17 : vector<8x128xf32>
      %c0_15 = arith.constant 0 : index
      %c0_16 = arith.constant 0 : index
      %c0_17 = arith.constant 0 : index
      %19 = vector.load %arg5[%c0_15, %c0_16, %c0_17] : memref<8x4x128xbf16, #tpu.memory_space<vmem>>, vector<8x4x128xbf16>
      %20 = arith.extf %19 : vector<8x4x128xbf16> to vector<8x4x128xf32>
      %cst_18 = arith.constant dense<0.000000e+00> : vector<8x128xf32>
      %21 = vector.multi_reduction <add>, %20, %cst_18 [1] : vector<8x4x128xf32> to vector<8x128xf32>
      %cst_19 = arith.constant 4.000000e+00 : f32
      %22 = vector.broadcast %cst_19 : f32 to vector<8x128xf32>
      %23 = arith.divf %21, %22 : vector<8x128xf32>
      %24 = arith.truncf %23 : vector<8x128xf32> to vector<8x128xbf16>
      %c0_20 = arith.constant 0 : index
      %c0_21 = arith.constant 0 : index
      %25 = vector.load %arg6[%c0_20, %c0_21] : memref<128x128xbf16, #tpu.memory_space<vmem>>, vector<128x128xbf16>
      %cst_22 = arith.constant dense<0.000000e+00> : vector<8x128xf32>
      %26 = tpu.matmul %24, %25, %cst_22 {dimension_numbers = #tpu.dot_dimension_numbers<[1], [0], [0], [1], [0, 0, 1, 1], [], []>} : vector<8x128xbf16>, vector<128x128xbf16>, vector<8x128xf32> -> vector<8x128xf32>
      %c0_23 = arith.constant 0 : index
      %c0_24 = arith.constant 0 : index
      %27 = vector.load %arg7[%c0_23, %c0_24] : memref<1x128xf32, #tpu.memory_space<vmem>>, vector<1x128xf32>
      %28 = vector.broadcast %27 : vector<1x128xf32> to vector<8x128xf32>
      %29 = arith.addf %26, %28 : vector<8x128xf32>
      %30 = arith.truncf %18 : vector<8x128xf32> to vector<8x128xbf16>
      %c0_25 = arith.constant 0 : index
      %c0_26 = arith.constant 0 : index
      %31 = vector.load %arg8[%c0_25, %c0_26] : memref<128x128xbf16, #tpu.memory_space<vmem>>, vector<128x128xbf16>
      %cst_27 = arith.constant dense<0.000000e+00> : vector<8x128xf32>
      %32 = tpu.matmul %30, %31, %cst_27 {dimension_numbers = #tpu.dot_dimension_numbers<[1], [0], [0], [1], [0, 0, 1, 1], [], []>} : vector<8x128xbf16>, vector<128x128xbf16>, vector<8x128xf32> -> vector<8x128xf32>
      %c0_28 = arith.constant 0 : index
      %c0_29 = arith.constant 0 : index
      %33 = vector.load %arg9[%c0_28, %c0_29] : memref<1x128xf32, #tpu.memory_space<vmem>>, vector<1x128xf32>
      %34 = vector.broadcast %33 : vector<1x128xf32> to vector<8x128xf32>
      %35 = arith.addf %32, %34 : vector<8x128xf32>
      %c0_30 = arith.constant 0 : index
      %c0_31 = arith.constant 0 : index
      %36 = vector.load %arg10[%c0_30, %c0_31] : memref<8x128xf32, #tpu.memory_space<vmem>>, vector<8x128xf32>
      tpu.vector_store %arg10[%c0_30, %c0_31], %35 {strides = array<i32>} : memref<8x128xf32, #tpu.memory_space<vmem>>, vector<8x128xf32>,
      %37 = arith.mulf %18, %18 : vector<8x128xf32>
      %cst_32 = arith.constant dense<0.000000e+00> : vector<8xf32>
      %38 = vector.multi_reduction <add>, %37, %cst_32 [1] : vector<8x128xf32> to vector<8xf32>
      %39 = vector.shape_cast %38 : vector<8xf32> to vector<8x1xf32>
      %cst_33 = arith.constant 9.99999996E-13 : f32
      %40 = vector.broadcast %cst_33 : f32 to vector<8x1xf32>
      %41 = arith.addf %39, %40 : vector<8x1xf32>
      %42 = math.rsqrt %41 : vector<8x1xf32>
      %43 = vector.broadcast %42 : vector<8x1xf32> to vector<8x128xf32>
      %44 = arith.mulf %18, %43 : vector<8x128xf32>
      %45 = arith.mulf %29, %29 : vector<8x128xf32>
      %cst_34 = arith.constant dense<0.000000e+00> : vector<8xf32>
      %46 = vector.multi_reduction <add>, %45, %cst_34 [1] : vector<8x128xf32> to vector<8xf32>
      %47 = vector.shape_cast %46 : vector<8xf32> to vector<8x1xf32>
      %cst_35 = arith.constant 9.99999996E-13 : f32
      %48 = vector.broadcast %cst_35 : f32 to vector<8x1xf32>
      %49 = arith.addf %47, %48 : vector<8x1xf32>
      %50 = math.rsqrt %49 : vector<8x1xf32>
      %51 = vector.broadcast %50 : vector<8x1xf32> to vector<8x128xf32>
      %52 = arith.mulf %29, %51 : vector<8x128xf32>
      %53 = arith.truncf %44 : vector<8x128xf32> to vector<8x128xbf16>
      %54 = arith.truncf %52 : vector<8x128xf32> to vector<8x128xbf16>
      %cst_36 = arith.constant dense<0.000000e+00> : vector<8x8xf32>
      %55 = tpu.matmul %53, %54, %cst_36 {dimension_numbers = #tpu.dot_dimension_numbers<[1], [1], [0], [0], [0, 0, 1, 0], [], []>} : vector<8x128xbf16>, vector<8x128xbf16>, vector<8x8xf32> -> vector<8x8xf32>
      %cst_37 = arith.constant 14.2857141 : f32
      %56 = vector.broadcast %cst_37 : f32 to vector<8x8xf32>
      %57 = arith.mulf %56, %55 : vector<8x8xf32>
      %c0_38 = arith.constant 0 : index
      %c0_39 = arith.constant 0 : index
      %58 = vector.load %arg11[%c0_38, %c0_39] : memref<8x8xf32, #tpu.memory_space<vmem>>, vector<8x8xf32>
      tpu.vector_store %arg11[%c0_38, %c0_39], %57 {strides = array<i32>} : memref<8x8xf32, #tpu.memory_space<vmem>>, vector<8x8xf32>,
    } else {
    }
    return
  }
  func.func @transform_0(%arg0: i32) -> (i32, i32) {
    %c0_i32 = arith.constant 0 : i32
    %c0_i32_0 = arith.constant 0 : i32
    return %c0_i32, %arg0 : i32, i32
  }
  func.func @transform_1(%arg0: i32) -> (i32, i32) {
    %c0_i32 = arith.constant 0 : i32
    %c0_i32_0 = arith.constant 0 : i32
    return %c0_i32, %arg0 : i32, i32
  }
  func.func @transform_2(%arg0: i32) -> (i32, i32) {
    %c0_i32 = arith.constant 0 : i32
    %c0_i32_0 = arith.constant 0 : i32
    return %arg0, %c0_i32 : i32, i32
  }
  func.func @transform_3(%arg0: i32) -> (i32, i32) {
    %c0_i32 = arith.constant 0 : i32
    %c0_i32_0 = arith.constant 0 : i32
    %c0_i32_1 = arith.constant 0 : i32
    return %c0_i32, %c0_i32_0 : i32, i32
  }
  func.func @transform_4(%arg0: i32) -> (i32, i32, i32) {
    %c0_i32 = arith.constant 0 : i32
    %c0_i32_0 = arith.constant 0 : i32
    %c0_i32_1 = arith.constant 0 : i32
    %c0_i32_2 = arith.constant 0 : i32
    return %c0_i32, %c0_i32_0, %c0_i32_1 : i32, i32, i32
  }
  func.func @transform_5(%arg0: i32) -> (i32, i32) {
    %c0_i32 = arith.constant 0 : i32
    %c0_i32_0 = arith.constant 0 : i32
    %c0_i32_1 = arith.constant 0 : i32
    return %c0_i32, %c0_i32_0 : i32, i32
  }
  func.func @transform_6(%arg0: i32) -> (i32, i32) {
    %c0_i32 = arith.constant 0 : i32
    %c0_i32_0 = arith.constant 0 : i32
    %c0_i32_1 = arith.constant 0 : i32
    return %c0_i32, %c0_i32_0 : i32, i32
  }
  func.func @transform_7(%arg0: i32) -> (i32, i32) {
    %c0_i32 = arith.constant 0 : i32
    %c0_i32_0 = arith.constant 0 : i32
    %c0_i32_1 = arith.constant 0 : i32
    return %c0_i32, %c0_i32_0 : i32, i32
  }
  func.func @transform_8(%arg0: i32) -> (i32, i32) {
    %c0_i32 = arith.constant 0 : i32
    %c0_i32_0 = arith.constant 0 : i32
    %c0_i32_1 = arith.constant 0 : i32
    return %c0_i32, %c0_i32_0 : i32, i32
  }
  func.func @transform_9(%arg0: i32) -> (i32, i32) {
    %c0_i32 = arith.constant 0 : i32
    %c0_i32_0 = arith.constant 0 : i32
    %c0_i32_1 = arith.constant 0 : i32
    return %c0_i32, %c0_i32_0 : i32, i32
  }
  func.func @transform_10(%arg0: i32) -> (i32, i32) {
    %c0_i32 = arith.constant 0 : i32
    %c0_i32_0 = arith.constant 0 : i32
    %c0_i32_1 = arith.constant 0 : i32
    return %c0_i32, %c0_i32_0 : i32, i32
  }
}

</mosaic_0001>

<llo_original>
// kernel: tpu_custom_call.1
$region0: #{tpu_custom_call.1}
  #allocation0 [shape = 'u32[]', space=smem, size = 0x4, offset = 0x4, fixed_abs, tag = 'smem constant byte address 0x4 - core index']
  #allocation1 [shape = 'u32[144,128]{1,0:T(1,128)}', space=vmem, size = 0x12000, scoped, tag = 'internal scratch']
  #allocation2 [shape = 'f32[8,128]{1,0:T(8,128)}', space=vmem, size = 0x1000, scoped, tag = 'scratch operand']
  %s0 = inlined_call_operand.hbm [shape: bf16[8,1024], index: 0, kind: input, shape index: {}]
  %s1 = inlined_call_operand.hbm [shape: bf16[1,1024], index: 1, kind: input, shape index: {}]
  %s2 = inlined_call_operand.hbm [shape: bf16[1024,128], index: 2, kind: input, shape index: {}]
  %s3 = inlined_call_operand.vmem [shape: f32[1,128], index: 3, kind: input, shape index: {}]
  %s4 = inlined_call_operand.hbm [shape: bf16[8,4,128], index: 4, kind: input, shape index: {}]
  %s5 = inlined_call_operand.hbm [shape: bf16[128,128], index: 5, kind: input, shape index: {}]
  %s6 = inlined_call_operand.vmem [shape: f32[1,128], index: 6, kind: input, shape index: {}]
  %s7 = inlined_call_operand.hbm [shape: bf16[128,128], index: 7, kind: input, shape index: {}]
  %s8 = inlined_call_operand.vmem [shape: f32[1,128], index: 8, kind: input, shape index: {}]
  %s9 = inlined_call_operand.hbm [shape: f32[8,128], index: 9, kind: output, shape index: {0}]
  %s10 = inlined_call_operand.hbm [shape: f32[8,8], index: 10, kind: output, shape index: {1}]
  %11 = xla_tuple %s9, %s10
  %s12 = sld [smem:[#allocation0]]
  $region109: #{tpu_custom_call.1} parent=0
    _
  %s14 = ssub.s32 1, %s12
  %s15 = scalar_select 0, %s14, %s12
  $region1: #{tpu_custom_call.1} parent=0
    #allocation3 [shape = 'u8[16384]{0}', space=vmem, size = 0x4000, scoped, tag = 'input window, operand 0']
    #allocation4 [shape = 's32[2]{0}', space=sflag, size = 0x8, scoped, tag = 'scoped memory for tpu_custom_call.1']
    #allocation5 [shape = 's32[2]{0}', space=sflag, size = 0x8, scoped, tag = 'scoped memory for tpu_custom_call.1']
    #allocation6 [shape = 'u8[4096]{0}', space=vmem, size = 0x1000, scoped, tag = 'input window, operand 1']
    #allocation7 [shape = 's32[2]{0}', space=sflag, size = 0x8, scoped, tag = 'scoped memory for tpu_custom_call.1']
    #allocation8 [shape = 'u8[262144]{0}', space=vmem, size = 0x40000, scoped, tag = 'input window, operand 2']
    #allocation9 [shape = 'u8[8192]{0}', space=vmem, size = 0x2000, scoped, tag = 'input window, operand 4, single buffered']
    #allocation10 [shape = 's32[1]{0}', space=sflag, size = 0x4, scoped, tag = 'scoped memory for tpu_custom_call.1']
    #allocation11 [shape = 'u8[32768]{0}', space=vmem, size = 0x8000, scoped, tag = 'input window, operand 5, single buffered']
    #allocation12 [shape = 'u8[32768]{0}', space=vmem, size = 0x8000, scoped, tag = 'input window, operand 7, single buffered']
    #allocation13 [shape = 's32[1]{0}', space=sflag, size = 0x4, scoped, tag = 'scoped memory for tpu_custom_call.1']
    #allocation14 [shape = 'u8[4096]{0}', space=vmem, size = 0x1000, scoped, tag = 'output window, operand 0, single buffered']
    #allocation15 [shape = 'u8[4096]{0}', space=vmem, size = 0x1000, scoped, tag = 'output window, operand 1, single buffered']
    #allocation16 [shape = 's32[1]{0}', space=sflag, size = 0x4, scoped, tag = 'scoped memory for tpu_custom_call.1']
    %16 = vsyncpa [#allocation4], 0
    %s17 = scalar_lea.sflag [#allocation4], 1
    %18 = vsyncpa %s17, 0
    %19 = vsyncpa [#allocation7], 0
    %s20 = scalar_lea.sflag [#allocation7], 1
    %21 = vsyncpa %s20, 0
    %22 = vsyncpa [#allocation10], 0
    %23 = vsyncpa [#allocation13], 0
    %24 = vsyncpa [#allocation5], 0
    %25 = vsyncpa [#allocation16], 0
    loop: start=0, step=1, limit=4
    $region2: #{tpu_custom_call.1} parent=1 // loop_pre_header
      _
    $region3: #{tpu_custom_call.1} parent=1 // loop_header
      %s27 = sphi 0, %s31
      %p28 = scmp.ge.s32.totalorder %s27, 4
      %s37 = sphi 0, %s39
      %s40 = sphi 0, %s37
      %s41 = sphi 0, %s40
      %s57 = sphi 0, %s41
      %s63 = sphi 0, %s65
      %s66 = sphi 0, %s63
      %s67 = sphi 0, %s66
      %s83 = sphi 0, %s67
      %s89 = sphi 0, %s91
      %s92 = sphi 0, %s89
      %s93 = sphi 0, %s92
      %s109 = sphi 0, %s93
      %s113 = sphi 0, %s113
      %s115 = sphi 0, %s113
      %s116 = sphi 0, %s115
      %s130 = sphi 0, %s116
      %s134 = sphi 0, %s134
      %s136 = sphi 0, %s134
      %s137 = sphi 0, %s136
      %s151 = sphi 0, %s137
      %s155 = sphi 0, %s155
      %s157 = sphi 0, %s155
      %s158 = sphi 0, %s157
      %s172 = sphi 0, %s158
      %s176 = sphi 0, %s176
      %s178 = sphi 0, %s176
      %s179 = sphi 0, %s178
      %s193 = sphi 0, %s179
      %s197 = sphi 0, %s197
      %s199 = sphi 0, %s197
      %s200 = sphi 0, %s199
      %s214 = sphi 0, %s200
      %s218 = sphi 0, %s218
      %s220 = sphi 0, %s218
      %s221 = sphi 0, %s220
      %s235 = sphi 0, %s221
      %s239 = sphi 0, %s239
      %s241 = sphi 0, %s239
      %s242 = sphi 0, %s241
      %s256 = sphi 0, %s242
      %s260 = sphi 0, %s260
      %s262 = sphi 0, %s260
      %s263 = sphi 0, %s262
      %s277 = sphi 0, %s263
    $region4: #{tpu_custom_call.1} parent=1 // loop_header_branch
      %30 = sbr.rel (%p28) target = $region8
    $region5: #{tpu_custom_call.1} parent=1 // loop_body
      %s32 = ssub.s32 %s27, 1
      %s33 = ssub.s32 %s27, 2
      %s34 = sadd.s32 %s27, 1
      %s35 = ssub.s32 %s27, %s34
      %p36 = scmp.eq.s32.totalorder %s35, 0
      %s38 = sadd.s32 %s37, 1
      %s39 = scalar_select %p36, %s37, %s38
      %p42 = pneg %p36
      %p43 = scmp.eq.s32.totalorder %s27, 1
      %p44 = por %p42, %p43
      %p45 = scmp.ne.s32.totalorder %s37, %s40
      %p46 = scmp.eq.s32.totalorder %s27, 0
      %p47 = por %p45, %p46
      %p48 = scmp.ne.s32.totalorder %s37, %s40
      %p49 = scmp.eq.s32.totalorder %s32, 1
      %p50 = por %p48, %p49
      %p51 = scmp.ne.s32.totalorder %s40, %s41
      %p52 = scmp.eq.s32.totalorder %s32, 0
      %p53 = por %p51, %p52
      %p54 = scmp.ne.s32.totalorder %s40, %s41
      %p55 = scmp.eq.s32.totalorder %s33, 1
      %p56 = por %p54, %p55
      %p58 = scmp.ne.s32.totalorder %s41, %s57
      %p59 = scmp.eq.s32.totalorder %s33, 0
      %p60 = por %p58, %p59
      %s61 = ssub.s32 %s27, %s34
      %p62 = scmp.eq.s32.totalorder %s61, 0
      %s64 = sadd.s32 %s63, 1
      %s65 = scalar_select %p62, %s63, %s64
      %p68 = pneg %p62
      %p69 = scmp.eq.s32.totalorder %s27, 1
      %p70 = por %p68, %p69
      %p71 = scmp.ne.s32.totalorder %s63, %s66
      %p72 = scmp.eq.s32.totalorder %s27, 0
      %p73 = por %p71, %p72
      %p74 = scmp.ne.s32.totalorder %s63, %s66
      %p75 = scmp.eq.s32.totalorder %s32, 1
      %p76 = por %p74, %p75
      %p77 = scmp.ne.s32.totalorder %s66, %s67
      %p78 = scmp.eq.s32.totalorder %s32, 0
      %p79 = por %p77, %p78
      %p80 = scmp.ne.s32.totalorder %s66, %s67
      %p81 = scmp.eq.s32.totalorder %s33, 1
      %p82 = por %p80, %p81
      %p84 = scmp.ne.s32.totalorder %s67, %s83
      %p85 = scmp.eq.s32.totalorder %s33, 0
      %p86 = por %p84, %p85
      %s87 = ssub.s32 %s27, %s34
      %p88 = scmp.eq.s32.totalorder %s87, 0
      %s90 = sadd.s32 %s89, 1
      %s91 = scalar_select %p88, %s89, %s90
      %p94 = pneg %p88
      %p95 = scmp.eq.s32.totalorder %s27, 1
      %p96 = por %p94, %p95
      %p97 = scmp.ne.s32.totalorder %s89, %s92
      %p98 = scmp.eq.s32.totalorder %s27, 0
      %p99 = por %p97, %p98
      %p100 = scmp.ne.s32.totalorder %s89, %s92
      %p101 = scmp.eq.s32.totalorder %s32, 1
      %p102 = por %p100, %p101
      %p103 = scmp.ne.s32.totalorder %s92, %s93
      %p104 = scmp.eq.s32.totalorder %s32, 0
      %p105 = por %p103, %p104
      %p106 = scmp.ne.s32.totalorder %s92, %s93
      %p107 = scmp.eq.s32.totalorder %s33, 1
      %p108 = por %p106, %p107
      %p110 = scmp.ne.s32.totalorder %s93, %s109
      %p111 = scmp.eq.s32.totalorder %s33, 0
      %p112 = por %p110, %p111
      %s114 = sadd.s32 %s113, 1
      %p117 = scmp.eq.s32.totalorder %s27, 1
      %p118 = scmp.ne.s32.totalorder %s113, %s115
      %p119 = scmp.eq.s32.totalorder %s27, 0
      %p120 = por %p118, %p119
      %p121 = scmp.ne.s32.totalorder %s113, %s115
      %p122 = scmp.eq.s32.totalorder %s32, 1
      %p123 = por %p121, %p122
      %p124 = scmp.ne.s32.totalorder %s115, %s116
      %p125 = scmp.eq.s32.totalorder %s32, 0
      %p126 = por %p124, %p125
      %p127 = scmp.ne.s32.totalorder %s115, %s116
      %p128 = scmp.eq.s32.totalorder %s33, 1
      %p129 = por %p127, %p128
      %p131 = scmp.ne.s32.totalorder %s116, %s130
      %p132 = scmp.eq.s32.totalorder %s33, 0
      %p133 = por %p131, %p132
      %s135 = sadd.s32 %s134, 1
      %p138 = scmp.eq.s32.totalorder %s27, 1
      %p139 = scmp.ne.s32.totalorder %s134, %s136
      %p140 = scmp.eq.s32.totalorder %s27, 0
      %p141 = por %p139, %p140
      %p142 = scmp.ne.s32.totalorder %s134, %s136
      %p143 = scmp.eq.s32.totalorder %s32, 1
      %p144 = por %p142, %p143
      %p145 = scmp.ne.s32.totalorder %s136, %s137
      %p146 = scmp.eq.s32.totalorder %s32, 0
      %p147 = por %p145, %p146
      %p148 = scmp.ne.s32.totalorder %s136, %s137
      %p149 = scmp.eq.s32.totalorder %s33, 1
      %p150 = por %p148, %p149
      %p152 = scmp.ne.s32.totalorder %s137, %s151
      %p153 = scmp.eq.s32.totalorder %s33, 0
      %p154 = por %p152, %p153
      %s156 = sadd.s32 %s155, 1
      %p159 = scmp.eq.s32.totalorder %s27, 1
      %p160 = scmp.ne.s32.totalorder %s155, %s157
      %p161 = scmp.eq.s32.totalorder %s27, 0
      %p162 = por %p160, %p161
      %p163 = scmp.ne.s32.totalorder %s155, %s157
      %p164 = scmp.eq.s32.totalorder %s32, 1
      %p165 = por %p163, %p164
      %p166 = scmp.ne.s32.totalorder %s157, %s158
      %p167 = scmp.eq.s32.totalorder %s32, 0
      %p168 = por %p166, %p167
      %p169 = scmp.ne.s32.totalorder %s157, %s158
      %p170 = scmp.eq.s32.totalorder %s33, 1
      %p171 = por %p169, %p170
      %p173 = scmp.ne.s32.totalorder %s158, %s172
      %p174 = scmp.eq.s32.totalorder %s33, 0
      %p175 = por %p173, %p174
      %s177 = sadd.s32 %s176, 1
      %p180 = scmp.eq.s32.totalorder %s27, 1
      %p181 = scmp.ne.s32.totalorder %s176, %s178
      %p182 = scmp.eq.s32.totalorder %s27, 0
      %p183 = por %p181, %p182
      %p184 = scmp.ne.s32.totalorder %s176, %s178
      %p185 = scmp.eq.s32.totalorder %s32, 1
      %p186 = por %p184, %p185
      %p187 = scmp.ne.s32.totalorder %s178, %s179
      %p188 = scmp.eq.s32.totalorder %s32, 0
      %p189 = por %p187, %p188
      %p190 = scmp.ne.s32.totalorder %s178, %s179
      %p191 = scmp.eq.s32.totalorder %s33, 1
      %p192 = por %p190, %p191
      %p194 = scmp.ne.s32.totalorder %s179, %s193
      %p195 = scmp.eq.s32.totalorder %s33, 0
      %p196 = por %p194, %p195
      %s198 = sadd.s32 %s197, 1
      %p201 = scmp.eq.s32.totalorder %s27, 1
      %p202 = scmp.ne.s32.totalorder %s197, %s199
      %p203 = scmp.eq.s32.totalorder %s27, 0
      %p204 = por %p202, %p203
      %p205 = scmp.ne.s32.totalorder %s197, %s199
      %p206 = scmp.eq.s32.totalorder %s32, 1
      %p207 = por %p205, %p206
      %p208 = scmp.ne.s32.totalorder %s199, %s200
      %p209 = scmp.eq.s32.totalorder %s32, 0
      %p210 = por %p208, %p209
      %p211 = scmp.ne.s32.totalorder %s199, %s200
      %p212 = scmp.eq.s32.totalorder %s33, 1
      %p213 = por %p211, %p212
      %p215 = scmp.ne.s32.totalorder %s200, %s214
      %p216 = scmp.eq.s32.totalorder %s33, 0
      %p217 = por %p215, %p216
      %s219 = sadd.s32 %s218, 1
      %p222 = scmp.eq.s32.totalorder %s27, 1
      %p223 = scmp.ne.s32.totalorder %s218, %s220
      %p224 = scmp.eq.s32.totalorder %s27, 0
      %p225 = por %p223, %p224
      %p226 = scmp.ne.s32.totalorder %s218, %s220
      %p227 = scmp.eq.s32.totalorder %s32, 1
      %p228 = por %p226, %p227
      %p229 = scmp.ne.s32.totalorder %s220, %s221
      %p230 = scmp.eq.s32.totalorder %s32, 0
      %p231 = por %p229, %p230
      %p232 = scmp.ne.s32.totalorder %s220, %s221
      %p233 = scmp.eq.s32.totalorder %s33, 1
      %p234 = por %p232, %p233
      %p236 = scmp.ne.s32.totalorder %s221, %s235
      %p237 = scmp.eq.s32.totalorder %s33, 0
      %p238 = por %p236, %p237
      %s240 = sadd.s32 %s239, 1
      %p243 = scmp.eq.s32.totalorder %s27, 1
      %p244 = scmp.ne.s32.totalorder %s239, %s241
      %p245 = scmp.eq.s32.totalorder %s27, 0
      %p246 = por %p244, %p245
      %p247 = scmp.ne.s32.totalorder %s239, %s241
      %p248 = scmp.eq.s32.totalorder %s32, 1
      %p249 = por %p247, %p248
      %p250 = scmp.ne.s32.totalorder %s241, %s242
      %p251 = scmp.eq.s32.totalorder %s32, 0
      %p252 = por %p250, %p251
      %p253 = scmp.ne.s32.totalorder %s241, %s242
      %p254 = scmp.eq.s32.totalorder %s33, 1
      %p255 = por %p253, %p254
      %p257 = scmp.ne.s32.totalorder %s242, %s256
      %p258 = scmp.eq.s32.totalorder %s33, 0
      %p259 = por %p257, %p258
      %s261 = sadd.s32 %s260, 1
      %p264 = scmp.eq.s32.totalorder %s27, 1
      %p265 = scmp.ne.s32.totalorder %s260, %s262
      %p266 = scmp.eq.s32.totalorder %s27, 0
      %p267 = por %p265, %p266
      %p268 = scmp.ne.s32.totalorder %s260, %s262
      %p269 = scmp.eq.s32.totalorder %s32, 1
      %p270 = por %p268, %p269
      %p271 = scmp.ne.s32.totalorder %s262, %s263
      %p272 = scmp.eq.s32.totalorder %s32, 0
      %p273 = por %p271, %p272
      %p274 = scmp.ne.s32.totalorder %s262, %s263
      %p275 = scmp.eq.s32.totalorder %s33, 1
      %p276 = por %p274, %p275
      %p278 = scmp.ne.s32.totalorder %s263, %s277
      %p279 = scmp.eq.s32.totalorder %s33, 0
      %p280 = por %p278, %p279
      %p281 = scmp.le.s32.totalorder 1, %s27
      %p282 = scmp.lt.s32.totalorder %s27, 3
      %p283 = pnand %p281, %p282
      %p284 = pneg %p283
      // Predicated region
      $region9: #{tpu_custom_call.1} parent=5 // pred_check
        _
      $region10: #{tpu_custom_call.1} parent=5 // pred_check_branch
        %286 = sbr.rel (%p283) target = $region12
      $region11: #{tpu_custom_call.1} parent=5 // pred_region
        %s287 = ssub.s32 %s27, 1
        // Predicated region
        $region13: #{tpu_custom_call.1} parent=11 // pred_check
          %p288 = pneg %p126
        $region14: #{tpu_custom_call.1} parent=11 // pred_check_branch
          %290 = sbr.rel (%p288) target = $region16
        $region15: #{tpu_custom_call.1} parent=11 // pred_region
          _
        $region16: #{tpu_custom_call.1} parent=11 // pred_fallthru
          _
        // Predicated region
        $region17: #{tpu_custom_call.1} parent=11 // pred_check
          %p291 = pneg %p147
        $region18: #{tpu_custom_call.1} parent=11 // pred_check_branch
          %293 = sbr.rel (%p291) target = $region20
        $region19: #{tpu_custom_call.1} parent=11 // pred_region
          %s295 = ssub.s32 256, 256
          %296 = vsyncadd [#allocation10], %s295
          %s297 = sshll.u32 [#allocation9], 4
          %s298 = int_to_ptr.vmem [resolvable:$true] %s297
          %303 = dma.hbm_to_vmem [thread:$0]  %s4, 256, %s298, [#allocation10], 32, 32, 2
        $region20: #{tpu_custom_call.1} parent=11 // pred_fallthru
          _
        // Predicated region
        $region21: #{tpu_custom_call.1} parent=11 // pred_check
          %p304 = pneg %p168
        $region22: #{tpu_custom_call.1} parent=11 // pred_check_branch
          %306 = sbr.rel (%p304) target = $region24
        $region23: #{tpu_custom_call.1} parent=11 // pred_region
          %s308 = ssub.s32 1024, 1024
          %309 = vsyncadd [#allocation10], %s308
          %s310 = sshll.u32 [#allocation11], 4
          %s311 = int_to_ptr.vmem [resolvable:$true] %s310
          %316 = dma.hbm_to_vmem [thread:$0]  %s5, 1024, %s311, [#allocation10], 64, 64, 4
        $region24: #{tpu_custom_call.1} parent=11 // pred_fallthru
          _
        // Predicated region
        $region25: #{tpu_custom_call.1} parent=11 // pred_check
          %p317 = pneg %p189
        $region26: #{tpu_custom_call.1} parent=11 // pred_check_branch
          %319 = sbr.rel (%p317) target = $region28
        $region27: #{tpu_custom_call.1} parent=11 // pred_region
          _
        $region28: #{tpu_custom_call.1} parent=11 // pred_fallthru
          _
        // Predicated region
        $region29: #{tpu_custom_call.1} parent=11 // pred_check
          %p320 = pneg %p210
        $region30: #{tpu_custom_call.1} parent=11 // pred_check_branch
          %322 = sbr.rel (%p320) target = $region32
        $region31: #{tpu_custom_call.1} parent=11 // pred_region
          %s324 = ssub.s32 1024, 1024
          %325 = vsyncadd [#allocation13], %s324
          %s326 = sshll.u32 [#allocation12], 4
          %s327 = int_to_ptr.vmem [resolvable:$true] %s326
          %332 = dma.hbm_to_vmem [thread:$0]  %s7, 1024, %s327, [#allocation13], 64, 64, 4
        $region32: #{tpu_custom_call.1} parent=11 // pred_fallthru
          _
        // Predicated region
        $region33: #{tpu_custom_call.1} parent=11 // pred_check
          %p333 = pneg %p231
        $region34: #{tpu_custom_call.1} parent=11 // pred_check_branch
          %335 = sbr.rel (%p333) target = $region36
        $region35: #{tpu_custom_call.1} parent=11 // pred_region
          _
        $region36: #{tpu_custom_call.1} parent=11 // pred_fallthru
          _
      $region12: #{tpu_custom_call.1} parent=5 // pred_fallthru
        _
      %p336 = scmp.lt.s32.totalorder %s27, 2
      // Predicated region
      $region37: #{tpu_custom_call.1} parent=5 // pred_check
        %p337 = pneg %p336
      $region38: #{tpu_custom_call.1} parent=5 // pred_check_branch
        %339 = sbr.rel (%p337) target = $region40
      $region39: #{tpu_custom_call.1} parent=5 // pred_region
        // Predicated region
        $region41: #{tpu_custom_call.1} parent=39 // pred_check
          %p340 = pneg %p47
        $region42: #{tpu_custom_call.1} parent=39 // pred_check_branch
          %342 = sbr.rel (%p340) target = $region44
        $region43: #{tpu_custom_call.1} parent=39 // pred_region
          %s343 = sand.u32 %s37, 1
          %s344 = scalar_lea.sflag [#allocation4], %s343
          %s345 = sand.u32 %s37, 1
          %s346 = smul.addr %s345, 16
          %s347 = scalar_lea.vmem [#allocation3], %s346
          %s348 = smul.u32 4, %s27
          %s350 = ssub.s32 256, 256
          %351 = vsyncadd %s344, %s350
          %s352 = smul.addr %s348, 64
          %s353 = scalar_lea.hbm %s0, %s352
          %s355 = sshll.u32 %s347, 4
          %s356 = int_to_ptr.vmem [resolvable:$true] %s355
          %358 = dma.hbm_to_vmem [thread:$0]  %s353, 256, %s356, %s344
        $region44: #{tpu_custom_call.1} parent=39 // pred_fallthru
          _
        // Predicated region
        $region45: #{tpu_custom_call.1} parent=39 // pred_check
          %p359 = pneg %p73
        $region46: #{tpu_custom_call.1} parent=39 // pred_check_branch
          %361 = sbr.rel (%p359) target = $region48
        $region47: #{tpu_custom_call.1} parent=39 // pred_region
          %s362 = sand.u32 %s27, 1
          %s363 = scalar_lea.sflag [#allocation7], %s362
          %s364 = sand.u32 %s63, 1
          %s365 = smul.addr %s364, 4
          %s366 = scalar_lea.vmem [#allocation6], %s365
          %s367 = smul.u32 4, %s27
          %s369 = ssub.s32 64, 64
          %370 = vsyncadd %s363, %s369
          %s371 = smul.addr %s367, 16
          %s372 = scalar_lea.hbm %s1, %s371
          %s374 = sshll.u32 %s366, 4
          %s375 = int_to_ptr.vmem [resolvable:$true] %s374
          %377 = dma.hbm_to_vmem [thread:$0]  %s372, 64, %s375, %s363
        $region48: #{tpu_custom_call.1} parent=39 // pred_fallthru
          _
        // Predicated region
        $region49: #{tpu_custom_call.1} parent=39 // pred_check
          %p378 = pneg %p99
        $region50: #{tpu_custom_call.1} parent=39 // pred_check_branch
          %380 = sbr.rel (%p378) target = $region52
        $region51: #{tpu_custom_call.1} parent=39 // pred_region
          %s381 = sand.u32 %s27, 1
          %s382 = scalar_lea.sflag [#allocation7], %s381
          %s383 = sand.u32 %s89, 1
          %s384 = smul.addr %s383, 256
          %s385 = scalar_lea.vmem [#allocation8], %s384
          %s386 = smul.u32 64, %s27
          %s388 = ssub.s32 4096, 4096
          %389 = vsyncadd %s382, %s388
          %s390 = smul.addr %s386, 64
          %s391 = scalar_lea.hbm %s2, %s390
          %s392 = sshll.u32 %s385, 4
          %s393 = int_to_ptr.vmem [resolvable:$true] %s392
          %398 = dma.hbm_to_vmem [thread:$0]  %s391, 4096, %s393, %s382, 64, 64, 4
        $region52: #{tpu_custom_call.1} parent=39 // pred_fallthru
          _
      $region40: #{tpu_custom_call.1} parent=5 // pred_fallthru
        _
      %p399 = scmp.le.s32.totalorder 1, %s27
      %p400 = scmp.lt.s32.totalorder %s27, 3
      %p401 = pnand %p399, %p400
      %p402 = pneg %p401
      // Predicated region
      $region53: #{tpu_custom_call.1} parent=5 // pred_check
        _
      $region54: #{tpu_custom_call.1} parent=5 // pred_check_branch
        %404 = sbr.rel (%p401) target = $region56
      $region55: #{tpu_custom_call.1} parent=5 // pred_region
        %s405 = ssub.s32 %s27, 1
        %s406 = sand.u32 %s40, 1
        %s407 = scalar_lea.sflag [#allocation4], %s406
        %s408 = sand.u32 %s40, 1
        %s409 = smul.addr %s408, 16
        %s410 = scalar_lea.vmem [#allocation3], %s409
        // Predicated region
        $region57: #{tpu_custom_call.1} parent=55 // pred_check
          %p411 = pneg %p53
        $region58: #{tpu_custom_call.1} parent=55 // pred_check_branch
          %413 = sbr.rel (%p411) target = $region60
        $region59: #{tpu_custom_call.1} parent=55 // pred_region
          %414 = dma.done %s407, 256
        $region60: #{tpu_custom_call.1} parent=55 // pred_fallthru
          _
        %s415 = sand.u32 %s32, 1
        %s416 = scalar_lea.sflag [#allocation7], %s415
        %s417 = sand.u32 %s66, 1
        %s418 = smul.addr %s417, 4
        %s419 = scalar_lea.vmem [#allocation6], %s418
        // Predicated region
        $region61: #{tpu_custom_call.1} parent=55 // pred_check
          %p420 = pneg %p79
        $region62: #{tpu_custom_call.1} parent=55 // pred_check_branch
          %422 = sbr.rel (%p420) target = $region64
        $region63: #{tpu_custom_call.1} parent=55 // pred_region
          %423 = dma.done %s416, 64
        $region64: #{tpu_custom_call.1} parent=55 // pred_fallthru
          _
        %s424 = sand.u32 %s32, 1
        %s425 = scalar_lea.sflag [#allocation7], %s424
        %s426 = sand.u32 %s92, 1
        %s427 = smul.addr %s426, 256
        %s428 = scalar_lea.vmem [#allocation8], %s427
        // Predicated region
        $region65: #{tpu_custom_call.1} parent=55 // pred_check
          %p429 = pneg %p105
        $region66: #{tpu_custom_call.1} parent=55 // pred_check_branch
          %431 = sbr.rel (%p429) target = $region68
        $region67: #{tpu_custom_call.1} parent=55 // pred_region
          %432 = dma.done %s425, 4096
        $region68: #{tpu_custom_call.1} parent=55 // pred_fallthru
          _
        // Predicated region
        $region69: #{tpu_custom_call.1} parent=55 // pred_check
          %p433 = pneg %p147
        $region70: #{tpu_custom_call.1} parent=55 // pred_check_branch
          %435 = sbr.rel (%p433) target = $region72
        $region71: #{tpu_custom_call.1} parent=55 // pred_region
          %436 = dma.done [#allocation10], 256
        $region72: #{tpu_custom_call.1} parent=55 // pred_fallthru
          _
        // Predicated region
        $region73: #{tpu_custom_call.1} parent=55 // pred_check
          %p437 = pneg %p168
        $region74: #{tpu_custom_call.1} parent=55 // pred_check_branch
          %439 = sbr.rel (%p437) target = $region76
        $region75: #{tpu_custom_call.1} parent=55 // pred_region
          %440 = dma.done [#allocation10], 1024
        $region76: #{tpu_custom_call.1} parent=55 // pred_fallthru
          _
        // Predicated region
        $region77: #{tpu_custom_call.1} parent=55 // pred_check
          %p441 = pneg %p210
        $region78: #{tpu_custom_call.1} parent=55 // pred_check_branch
          %443 = sbr.rel (%p441) target = $region80
        $region79: #{tpu_custom_call.1} parent=55 // pred_region
          %444 = dma.done [#allocation13], 1024
        $region80: #{tpu_custom_call.1} parent=55 // pred_fallthru
          _
        %s445 = sand.u32 %s40, 1
        %s446 = scalar_lea.sflag [#allocation4], %s445
        %s447 = sand.u32 %s40, 1
        %s448 = smul.addr %s447, 16
        %s449 = scalar_lea.vmem [#allocation3], %s448
        %p450 = pneg %p53
        %p451 = pneg %p50
        %s452 = sand.u32 %s32, 1
        %s453 = scalar_lea.sflag [#allocation7], %s452
        %s454 = sand.u32 %s66, 1
        %s455 = smul.addr %s454, 4
        %s456 = scalar_lea.vmem [#allocation6], %s455
        %p457 = pneg %p79
        %p458 = pneg %p76
        %s459 = sand.u32 %s32, 1
        %s460 = scalar_lea.sflag [#allocation7], %s459
        %s461 = sand.u32 %s92, 1
        %s462 = smul.addr %s461, 256
        %s463 = scalar_lea.vmem [#allocation8], %s462
        %p464 = pneg %p105
        %p465 = pneg %p102
        %p466 = pneg %p126
        %p467 = pneg %p123
        %p468 = pneg %p147
        %p469 = pneg %p144
        %p470 = pneg %p168
        %p471 = pneg %p165
        %p472 = pneg %p189
        %p473 = pneg %p186
        %p474 = pneg %p210
        %p475 = pneg %p207
        %p476 = pneg %p231
        %p477 = pneg %p228
        %p478 = pneg %p252
        %p479 = pneg %p249
        %p480 = pneg %p273
        %p481 = pneg %p270
        %s482 = smul.u32 4, %s32
        %s483 = smul.u32 4, %s32
        %s484 = smul.u32 64, %s32
        %p486 = scmp.eq.s32.totalorder %s32, 0
        // Predicated region
        $region81: #{tpu_custom_call.1} parent=55 // pred_check
          %p487 = pneg %p486
        $region82: #{tpu_custom_call.1} parent=55 // pred_check_branch
          %489 = sbr.rel (%p487) target = $region84
        $region83: #{tpu_custom_call.1} parent=55 // pred_region
          %490 = vst [vmem:[#allocation2] sm:$0xff] 0.0
        $region84: #{tpu_custom_call.1} parent=55 // pred_fallthru
          _
        %v491 = vld [vmem:[%s410] sm:$0xff]
        %v492 = vld [vmem:[%s410 + $0x8] sm:$0xff]
        %v493 = vld [vmem:[%s419] sm:$0xf]
        %v496 = vunpack.c.l.s4 1966171168
        %v497 = vunpack.c.0.s8 %v496
        %v498 = vlaneseq
        %v499 = vshrl.u32 %v498, 7
        %v500 = vsub.s32 %v497, %v499
        %v501 = vrot.slane %v493, %v500
        %v502 = vcombine.high %v501, %v501
        %v504 = vunpack.c.l.s4 1966171168
        %v505 = vunpack.c.0.s8 %v504
        %v506 = vlaneseq
        %v507 = vshrl.u32 %v506, 7
        %v508 = vsub.s32 %v505, %v507
        %v509 = vrot.slane %v501, %v508
        %v511 = vunpack.c.l.s4 1966171168
        %v512 = vunpack.c.0.s8 %v511
        %v513 = vlaneseq
        %v514 = vshrl.u32 %v513, 7
        %v515 = vsub.s32 %v512, %v514
        %v516 = vrot.slane %v502, %v515
        %v517 = vcombine.high %v509, %v509
        %v518 = vcombine.high %v516, %v516
        %v520 = vpack.i.b16 %v509, %v509
        %v522 = vlaneseq
        %v523 = vshrl.u32 %v522, 7
        %v524 = vsub.s32 0, %v523
        %v525 = vrot.slane %v520, %v524
        %v527 = vpack.i.b16 %v516, %v516
        %v529 = vlaneseq
        %v530 = vshrl.u32 %v529, 7
        %v531 = vsub.s32 0, %v530
        %v532 = vrot.slane %v527, %v531
        %v534 = vpack.i.b16 %v517, %v517
        %v536 = vlaneseq
        %v537 = vshrl.u32 %v536, 7
        %v538 = vsub.s32 0, %v537
        %v539 = vrot.slane %v534, %v538
        %v541 = vpack.i.b16 %v518, %v518
        %v543 = vlaneseq
        %v544 = vshrl.u32 %v543, 7
        %v545 = vsub.s32 0, %v544
        %v546 = vrot.slane %v541, %v545
        %v551 = vunpack.c.l.b16 %v525
        %v552 = vunpack.c.l.b16 %v532
        %v553 = vunpack.c.l.b16 %v539
        %v554 = vunpack.c.l.b16 %v546
        %v555 = vpack.c.b16 %v552, %v551
        %v556 = vpack.c.b16 %v554, %v553
        %v559 = vadd.bf16 %v491, %v555
        %v560 = vadd.bf16 %v492, %v556
        %v561 = vld [vmem:[#allocation2] sm:$0xff]
        %v562 = vld [vmem:[%s428] sm:$0xf]
        %v563 = vld [vmem:[%s428 + $0x4] sm:$0xf]
        %v564 = vld [vmem:[%s428 + $0x8] sm:$0xf]
        %v565 = vld [vmem:[%s428 + $0xc] sm:$0xf]
        %v566 = vld [vmem:[%s428 + $0x10] sm:$0xf]
        %v567 = vld [vmem:[%s428 + $0x14] sm:$0xf]
        %v568 = vld [vmem:[%s428 + $0x18] sm:$0xf]
        %v569 = vld [vmem:[%s428 + $0x1c] sm:$0xf]
        %v570 = vld [vmem:[%s428 + $0x20] sm:$0xf]
        %v571 = vld [vmem:[%s428 + $0x24] sm:$0xf]
        %v572 = vld [vmem:[%s428 + $0x28] sm:$0xf]
        %v573 = vld [vmem:[%s428 + $0x2c] sm:$0xf]
        %v574 = vld [vmem:[%s428 + $0x30] sm:$0xf]
        %v575 = vld [vmem:[%s428 + $0x34] sm:$0xf]
        %v576 = vld [vmem:[%s428 + $0x38] sm:$0xf]
        %v577 = vld [vmem:[%s428 + $0x3c] sm:$0xf]
        %v578 = vld [vmem:[%s428 + $0x40] sm:$0xf]
        %v579 = vld [vmem:[%s428 + $0x44] sm:$0xf]
        %v580 = vld [vmem:[%s428 + $0x48] sm:$0xf]
        %v581 = vld [vmem:[%s428 + $0x4c] sm:$0xf]
        %v582 = vld [vmem:[%s428 + $0x50] sm:$0xf]
        %v583 = vld [vmem:[%s428 + $0x54] sm:$0xf]
        %v584 = vld [vmem:[%s428 + $0x58] sm:$0xf]
        %v585 = vld [vmem:[%s428 + $0x5c] sm:$0xf]
        %v586 = vld [vmem:[%s428 + $0x60] sm:$0xf]
        %v587 = vld [vmem:[%s428 + $0x64] sm:$0xf]
        %v588 = vld [vmem:[%s428 + $0x68] sm:$0xf]
        %v589 = vld [vmem:[%s428 + $0x6c] sm:$0xf]
        %v590 = vld [vmem:[%s428 + $0x70] sm:$0xf]
        %v591 = vld [vmem:[%s428 + $0x74] sm:$0xf]
        %v592 = vld [vmem:[%s428 + $0x78] sm:$0xf]
        %v593 = vld [vmem:[%s428 + $0x7c] sm:$0xf]
        %v594 = vld [vmem:[%s428 + $0x80] sm:$0xf]
        %v595 = vld [vmem:[%s428 + $0x84] sm:$0xf]
        %v596 = vld [vmem:[%s428 + $0x88] sm:$0xf]
        %v597 = vld [vmem:[%s428 + $0x8c] sm:$0xf]
        %v598 = vld [vmem:[%s428 + $0x90] sm:$0xf]
        %v599 = vld [vmem:[%s428 + $0x94] sm:$0xf]
        %v600 = vld [vmem:[%s428 + $0x98] sm:$0xf]
        %v601 = vld [vmem:[%s428 + $0x9c] sm:$0xf]
        %v602 = vld [vmem:[%s428 + $0xa0] sm:$0xf]
        %v603 = vld [vmem:[%s428 + $0xa4] sm:$0xf]
        %v604 = vld [vmem:[%s428 + $0xa8] sm:$0xf]
        %v605 = vld [vmem:[%s428 + $0xac] sm:$0xf]
        %v606 = vld [vmem:[%s428 + $0xb0] sm:$0xf]
        %v607 = vld [vmem:[%s428 + $0xb4] sm:$0xf]
        %v608 = vld [vmem:[%s428 + $0xb8] sm:$0xf]
        %v609 = vld [vmem:[%s428 + $0xbc] sm:$0xf]
        %v610 = vld [vmem:[%s428 + $0xc0] sm:$0xf]
        %v611 = vld [vmem:[%s428 + $0xc4] sm:$0xf]
        %v612 = vld [vmem:[%s428 + $0xc8] sm:$0xf]
        %v613 = vld [vmem:[%s428 + $0xcc] sm:$0xf]
        %v614 = vld [vmem:[%s428 + $0xd0] sm:$0xf]
        %v615 = vld [vmem:[%s428 + $0xd4] sm:$0xf]
        %v616 = vld [vmem:[%s428 + $0xd8] sm:$0xf]
        %v617 = vld [vmem:[%s428 + $0xdc] sm:$0xf]
        %v618 = vld [vmem:[%s428 + $0xe0] sm:$0xf]
        %v619 = vld [vmem:[%s428 + $0xe4] sm:$0xf]
        %v620 = vld [vmem:[%s428 + $0xe8] sm:$0xf]
        %v621 = vld [vmem:[%s428 + $0xec] sm:$0xf]
        %v622 = vld [vmem:[%s428 + $0xf0] sm:$0xf]
        %v623 = vld [vmem:[%s428 + $0xf4] sm:$0xf]
        %v624 = vld [vmem:[%s428 + $0xf8] sm:$0xf]
        %v625 = vld [vmem:[%s428 + $0xfc] sm:$0xf]
        %v628 = vunpack.c.l.b16 %v559
        %v629 = vunpack.c.h.b16 %v559
        %v630 = vunpack.c.l.b16 %v560
        %v631 = vunpack.c.h.b16 %v560
        %v632 = vpack.c.b16 %v628, %v628
        %v633 = vpack.c.b16 %v629, %v629
        %v634 = vpack.c.b16 %v630, %v630
        %v635 = vpack.c.b16 %v631, %v631
        %v704 = vunpack.c.l.b16 %v562
        %v705 = vunpack.c.l.b16 %v563
        %v706 = vunpack.c.l.b16 %v564
        %v707 = vunpack.c.l.b16 %v565
        %v708 = vunpack.c.l.b16 %v566
        %v709 = vunpack.c.l.b16 %v567
        %v710 = vunpack.c.l.b16 %v568
        %v711 = vunpack.c.l.b16 %v569
        %v712 = vunpack.c.l.b16 %v570
        %v713 = vunpack.c.l.b16 %v571
        %v714 = vunpack.c.l.b16 %v572
        %v715 = vunpack.c.l.b16 %v573
        %v716 = vunpack.c.l.b16 %v574
        %v717 = vunpack.c.l.b16 %v575
        %v718 = vunpack.c.l.b16 %v576
        %v719 = vunpack.c.l.b16 %v577
        %v720 = vunpack.c.l.b16 %v578
        %v721 = vunpack.c.l.b16 %v579
        %v722 = vunpack.c.l.b16 %v580
        %v723 = vunpack.c.l.b16 %v581
        %v724 = vunpack.c.l.b16 %v582
        %v725 = vunpack.c.l.b16 %v583
        %v726 = vunpack.c.l.b16 %v584
        %v727 = vunpack.c.l.b16 %v585
        %v728 = vunpack.c.l.b16 %v586
        %v729 = vunpack.c.l.b16 %v587
        %v730 = vunpack.c.l.b16 %v588
        %v731 = vunpack.c.l.b16 %v589
        %v732 = vunpack.c.l.b16 %v590
        %v733 = vunpack.c.l.b16 %v591
        %v734 = vunpack.c.l.b16 %v592
        %v735 = vunpack.c.l.b16 %v593
        %v736 = vunpack.c.l.b16 %v594
        %v737 = vunpack.c.l.b16 %v595
        %v738 = vunpack.c.l.b16 %v596
        %v739 = vunpack.c.l.b16 %v597
        %v740 = vunpack.c.l.b16 %v598
        %v741 = vunpack.c.l.b16 %v599
        %v742 = vunpack.c.l.b16 %v600
        %v743 = vunpack.c.l.b16 %v601
        %v744 = vunpack.c.l.b16 %v602
        %v745 = vunpack.c.l.b16 %v603
        %v746 = vunpack.c.l.b16 %v604
        %v747 = vunpack.c.l.b16 %v605
        %v748 = vunpack.c.l.b16 %v606
        %v749 = vunpack.c.l.b16 %v607
        %v750 = vunpack.c.l.b16 %v608
        %v751 = vunpack.c.l.b16 %v609
        %v752 = vunpack.c.l.b16 %v610
        %v753 = vunpack.c.l.b16 %v611
        %v754 = vunpack.c.l.b16 %v612
        %v755 = vunpack.c.l.b16 %v613
        %v756 = vunpack.c.l.b16 %v614
        %v757 = vunpack.c.l.b16 %v615
        %v758 = vunpack.c.l.b16 %v616
        %v759 = vunpack.c.l.b16 %v617
        %v760 = vunpack.c.l.b16 %v618
        %v761 = vunpack.c.l.b16 %v619
        %v762 = vunpack.c.l.b16 %v620
        %v763 = vunpack.c.l.b16 %v621
        %v764 = vunpack.c.l.b16 %v622
        %v765 = vunpack.c.l.b16 %v623
        %v766 = vunpack.c.l.b16 %v624
        %v767 = vunpack.c.l.b16 %v625
        %v768 = vpack.c.b16 %v705, %v704
        %v769 = vpack.c.b16 %v707, %v706
        %v770 = vpack.c.b16 %v709, %v708
        %v771 = vpack.c.b16 %v711, %v710
        %v772 = vpack.c.b16 %v713, %v712
        %v773 = vpack.c.b16 %v715, %v714
        %v774 = vpack.c.b16 %v717, %v716
        %v775 = vpack.c.b16 %v719, %v718
        %v776 = vpack.c.b16 %v721, %v720
        %v777 = vpack.c.b16 %v723, %v722
        %v778 = vpack.c.b16 %v725, %v724
        %v779 = vpack.c.b16 %v727, %v726
        %v780 = vpack.c.b16 %v729, %v728
        %v781 = vpack.c.b16 %v731, %v730
        %v782 = vpack.c.b16 %v733, %v732
        %v783 = vpack.c.b16 %v735, %v734
        %v784 = vpack.c.b16 %v737, %v736
        %v785 = vpack.c.b16 %v739, %v738
        %v786 = vpack.c.b16 %v741, %v740
        %v787 = vpack.c.b16 %v743, %v742
        %v788 = vpack.c.b16 %v745, %v744
        %v789 = vpack.c.b16 %v747, %v746
        %v790 = vpack.c.b16 %v749, %v748
        %v791 = vpack.c.b16 %v751, %v750
        %v792 = vpack.c.b16 %v753, %v752
        %v793 = vpack.c.b16 %v755, %v754
        %v794 = vpack.c.b16 %v757, %v756
        %v795 = vpack.c.b16 %v759, %v758
        %v796 = vpack.c.b16 %v761, %v760
        %v797 = vpack.c.b16 %v763, %v762
        %v798 = vpack.c.b16 %v765, %v764
        %v799 = vpack.c.b16 %v767, %v766
        %832 = vmatprep.subr.bf16.mxu0 0
        %833 = vmatpush1.bf16.msra.mxu0 %v768
        %834 = vmatprep.subr.bf16.mxu0 0
        %835 = vmatpush1.bf16.msra.mxu0 %v769
        %836 = vmatprep.subr.bf16.mxu0 0
        %837 = vmatpush1.bf16.msra.mxu0 %v770
        %838 = vmatprep.subr.bf16.mxu0 0
        %839 = vmatpush1.bf16.msra.mxu0 %v771
        %840 = vmatprep.subr.bf16.mxu0 0
        %841 = vmatpush1.bf16.msra.mxu0 %v772
        %842 = vmatprep.subr.bf16.mxu0 0
        %843 = vmatpush1.bf16.msra.mxu0 %v773
        %844 = vmatprep.subr.bf16.mxu0 0
        %845 = vmatpush1.bf16.msra.mxu0 %v774
        %846 = vmatprep.subr.bf16.mxu0 0
        %847 = vmatpush1.bf16.msra.mxu0 %v775
        %848 = vmatprep.subr.bf16.mxu0 0
        %849 = vmatpush1.bf16.msra.mxu0 %v776
        %850 = vmatprep.subr.bf16.mxu0 0
        %851 = vmatpush1.bf16.msra.mxu0 %v777
        %852 = vmatprep.subr.bf16.mxu0 0
        %853 = vmatpush1.bf16.msra.mxu0 %v778
        %854 = vmatprep.subr.bf16.mxu0 0
        %855 = vmatpush1.bf16.msra.mxu0 %v779
        %856 = vmatprep.subr.bf16.mxu0 0
        %857 = vmatpush1.bf16.msra.mxu0 %v780
        %858 = vmatprep.subr.bf16.mxu0 0
        %859 = vmatpush1.bf16.msra.mxu0 %v781
        %860 = vmatprep.subr.bf16.mxu0 0
        %861 = vmatpush1.bf16.msra.mxu0 %v782
        %862 = vmatprep.subr.bf16.mxu0 0
        %863 = vmatpush1.bf16.msra.mxu0 %v783
        %864 = vmatprep.mubr.bf16.mxu0 %v633
        %865 = vmatmul.mubr.bf16.gmra.mrb[0].mxu0 %v632
        %v866 = vpop.f32.mrb[0].mxu0
        %v867 = vadd.f32 0.0, %v866
        %v868 = vpop.f32.mrb[0].mxu0
        %v869 = vpop.f32.mrb[0].mxu0
        %v870 = vpop.f32.mrb[0].mxu0
        %871 = vdwg.mxu0
        %872 = vmatprep.subr.bf16.mxu0 0
        %873 = vmatpush1.bf16.msra.mxu0 %v784
        %874 = vmatprep.subr.bf16.mxu0 0
        %875 = vmatpush1.bf16.msra.mxu0 %v785
        %876 = vmatprep.subr.bf16.mxu0 0
        %877 = vmatpush1.bf16.msra.mxu0 %v786
        %878 = vmatprep.subr.bf16.mxu0 0
        %879 = vmatpush1.bf16.msra.mxu0 %v787
        %880 = vmatprep.subr.bf16.mxu0 0
        %881 = vmatpush1.bf16.msra.mxu0 %v788
        %882 = vmatprep.subr.bf16.mxu0 0
        %883 = vmatpush1.bf16.msra.mxu0 %v789
        %884 = vmatprep.subr.bf16.mxu0 0
        %885 = vmatpush1.bf16.msra.mxu0 %v790
        %886 = vmatprep.subr.bf16.mxu0 0
        %887 = vmatpush1.bf16.msra.mxu0 %v791
        %888 = vmatprep.subr.bf16.mxu0 0
        %889 = vmatpush1.bf16.msra.mxu0 %v792
        %890 = vmatprep.subr.bf16.mxu0 0
        %891 = vmatpush1.bf16.msra.mxu0 %v793
        %892 = vmatprep.subr.bf16.mxu0 0
        %893 = vmatpush1.bf16.msra.mxu0 %v794
        %894 = vmatprep.subr.bf16.mxu0 0
        %895 = vmatpush1.bf16.msra.mxu0 %v795
        %896 = vmatprep.subr.bf16.mxu0 0
        %897 = vmatpush1.bf16.msra.mxu0 %v796
        %898 = vmatprep.subr.bf16.mxu0 0
        %899 = vmatpush1.bf16.msra.mxu0 %v797
        %900 = vmatprep.subr.bf16.mxu0 0
        %901 = vmatpush1.bf16.msra.mxu0 %v798
        %902 = vmatprep.subr.bf16.mxu0 0
        %903 = vmatpush1.bf16.msra.mxu0 %v799
        %904 = vmatprep.mubr.bf16.mxu0 %v635
        %905 = vmatmul.mubr.bf16.gmra.mrb[0].mxu0 %v634
        %v906 = vpop.f32.mrb[0].mxu0
        %v907 = vadd.f32 %v867, %v906
        %v908 = vpop.f32.mrb[0].mxu0
        %v909 = vpop.f32.mrb[0].mxu0
        %v910 = vpop.f32.mrb[0].mxu0
        %911 = vdwg.mxu0
        %v912 = vadd.f32 %v561, %v907
        %913 = vst [vmem:[#allocation2] sm:$0xff] %v912
        %p914 = scmp.eq.s32.totalorder %s32, 1
        // Predicated region
        $region85: #{tpu_custom_call.1} parent=55 // pred_check
          %p915 = pneg %p914
        $region86: #{tpu_custom_call.1} parent=55 // pred_check_branch
          %917 = sbr.rel (%p915) target = $region88
        $region87: #{tpu_custom_call.1} parent=55 // pred_region
          %v918 = vld [vmem:[#allocation2] sm:$0xff]
          %v919 = vld [vmem:[%s3] sm:$0x1]
          %v921 = vlaneseq
          %v922 = vshrl.u32 %v921, 7
          %v923 = vsub.s32 0, %v922
          %v924 = vrot.slane %v919, %v923
          %v926 = vadd.f32 %v918, %v924
          %v927 = vld [vmem:[#allocation9] sm:$0x3]
          %v928 = vld [vmem:[#allocation9 + $0x2] sm:$0x3]
          %v929 = vld [vmem:[#allocation9 + $0x4] sm:$0x3]
          %v930 = vld [vmem:[#allocation9 + $0x6] sm:$0x3]
          %v931 = vld [vmem:[#allocation9 + $0x8] sm:$0x3]
          %v932 = vld [vmem:[#allocation9 + $0xa] sm:$0x3]
          %v933 = vld [vmem:[#allocation9 + $0xc] sm:$0x3]
          %v934 = vld [vmem:[#allocation9 + $0xe] sm:$0x3]
          %v935 = vunpack.c.l.bf16 %v927
          %v936 = vunpack.c.l.bf16 %v928
          %v937 = vunpack.c.l.bf16 %v929
          %v938 = vunpack.c.l.bf16 %v930
          %v939 = vunpack.c.l.bf16 %v931
          %v940 = vunpack.c.l.bf16 %v932
          %v941 = vunpack.c.l.bf16 %v933
          %v942 = vunpack.c.l.bf16 %v934
          %vm943 = vcmask 1043456
          %v944 = vsel %vm943, %v935, 0.0
          %v945 = vrot.slane %v944, 4
          %v946 = vadd.f32 %v944, %v945
          %v947 = vrot.slane %v946, 2
          %v948 = vadd.f32 %v946, %v947
          %v949 = vrot.slane %v948, 1
          %v950 = vadd.f32 %v948, %v949
          %v951 = vsel %vm943, %v936, 0.0
          %v952 = vrot.slane %v951, 4
          %v953 = vadd.f32 %v951, %v952
          %v954 = vrot.slane %v953, 2
          %v955 = vadd.f32 %v953, %v954
          %v956 = vrot.slane %v955, 1
          %v957 = vadd.f32 %v955, %v956
          %v958 = vsel %vm943, %v937, 0.0
          %v959 = vrot.slane %v958, 4
          %v960 = vadd.f32 %v958, %v959
          %v961 = vrot.slane %v960, 2
          %v962 = vadd.f32 %v960, %v961
          %v963 = vrot.slane %v962, 1
          %v964 = vadd.f32 %v962, %v963
          %v965 = vsel %vm943, %v938, 0.0
          %v966 = vrot.slane %v965, 4
          %v967 = vadd.f32 %v965, %v966
          %v968 = vrot.slane %v967, 2
          %v969 = vadd.f32 %v967, %v968
          %v970 = vrot.slane %v969, 1
          %v971 = vadd.f32 %v969, %v970
          %v972 = vsel %vm943, %v939, 0.0
          %v973 = vrot.slane %v972, 4
          %v974 = vadd.f32 %v972, %v973
          %v975 = vrot.slane %v974, 2
          %v976 = vadd.f32 %v974, %v975
          %v977 = vrot.slane %v976, 1
          %v978 = vadd.f32 %v976, %v977
          %v979 = vsel %vm943, %v940, 0.0
          %v980 = vrot.slane %v979, 4
          %v981 = vadd.f32 %v979, %v980
          %v982 = vrot.slane %v981, 2
          %v983 = vadd.f32 %v981, %v982
          %v984 = vrot.slane %v983, 1
          %v985 = vadd.f32 %v983, %v984
          %v986 = vsel %vm943, %v941, 0.0
          %v987 = vrot.slane %v986, 4
          %v988 = vadd.f32 %v986, %v987
          %v989 = vrot.slane %v988, 2
          %v990 = vadd.f32 %v988, %v989
          %v991 = vrot.slane %v990, 1
          %v992 = vadd.f32 %v990, %v991
          %v993 = vsel %vm943, %v942, 0.0
          %v994 = vrot.slane %v993, 4
          %v995 = vadd.f32 %v993, %v994
          %v996 = vrot.slane %v995, 2
          %v997 = vadd.f32 %v995, %v996
          %v998 = vrot.slane %v997, 1
          %v999 = vadd.f32 %v997, %v998
          %v1000 = vrcp.pop 4.0
          %v1001 = vmul.f32 %v950, %v1000
          %v1002 = vmul.f32 %v957, %v1000
          %v1003 = vmul.f32 %v964, %v1000
          %v1004 = vmul.f32 %v971, %v1000
          %v1005 = vmul.f32 %v978, %v1000
          %v1006 = vmul.f32 %v985, %v1000
          %v1007 = vmul.f32 %v992, %v1000
          %v1008 = vmul.f32 %v999, %v1000
          %v1009 = vpack.c.bf16 %v1001, %v1001
          %v1010 = vpack.c.bf16 %v1002, %v1002
          %v1011 = vpack.c.bf16 %v1003, %v1003
          %v1012 = vpack.c.bf16 %v1004, %v1004
          %v1013 = vpack.c.bf16 %v1005, %v1005
          %v1014 = vpack.c.bf16 %v1006, %v1006
          %v1015 = vpack.c.bf16 %v1007, %v1007
          %v1016 = vpack.c.bf16 %v1008, %v1008
          %v1017 = vld [vmem:[#allocation11] sm:$0xf]
          %v1018 = vld [vmem:[#allocation11 + $0x4] sm:$0xf]
          %v1019 = vld [vmem:[#allocation11 + $0x8] sm:$0xf]
          %v1020 = vld [vmem:[#allocation11 + $0xc] sm:$0xf]
          %v1021 = vld [vmem:[#allocation11 + $0x10] sm:$0xf]
          %v1022 = vld [vmem:[#allocation11 + $0x14] sm:$0xf]
          %v1023 = vld [vmem:[#allocation11 + $0x18] sm:$0xf]
          %v1024 = vld [vmem:[#allocation11 + $0x1c] sm:$0xf]
          %v1025 = vld [vmem:[#allocation11 + $0x20] sm:$0xf]
          %v1026 = vld [vmem:[#allocation11 + $0x24] sm:$0xf]
          %v1027 = vld [vmem:[#allocation11 + $0x28] sm:$0xf]
          %v1028 = vld [vmem:[#allocation11 + $0x2c] sm:$0xf]
          %v1029 = vld [vmem:[#allocation11 + $0x30] sm:$0xf]
          %v1030 = vld [vmem:[#allocation11 + $0x34] sm:$0xf]
          %v1031 = vld [vmem:[#allocation11 + $0x38] sm:$0xf]
          %v1032 = vld [vmem:[#allocation11 + $0x3c] sm:$0xf]
          %v1033 = vld [vmem:[%s6] sm:$0x1]
          %v1035 = vlaneseq
          %v1036 = vshrl.u32 %v1035, 7
          %v1037 = vsub.s32 0, %v1036
          %v1038 = vrot.slane %v1033, %v1037
          %v1048 = vunpack.c.l.b16 %v1009
          %v1049 = vunpack.c.l.b16 %v1010
          %v1050 = vunpack.c.l.b16 %v1011
          %v1051 = vunpack.c.l.b16 %v1012
          %v1052 = vunpack.c.l.b16 %v1013
          %v1053 = vunpack.c.l.b16 %v1014
          %v1054 = vunpack.c.l.b16 %v1015
          %v1055 = vunpack.c.l.b16 %v1016
          %vm1056 = vcmask 1041409
          %v1057 = vsel %vm1056, %v1049, %v1048
          %vm1058 = vcmask 1042434
          %v1059 = vsel %vm1058, %v1050, %v1057
          %vm1060 = vcmask 1043459
          %v1061 = vsel %vm1060, %v1051, %v1059
          %vm1062 = vcmask 1044484
          %v1063 = vsel %vm1062, %v1052, %v1061
          %vm1064 = vcmask 1045509
          %v1065 = vsel %vm1064, %v1053, %v1063
          %vm1066 = vcmask 1046534
          %v1067 = vsel %vm1066, %v1054, %v1065
          %vm1068 = vcmask 1047559
          %v1069 = vsel %vm1068, %v1055, %v1067
          %v1070 = vpack.c.b16 %v1069, %v1069
          %v1088 = vunpack.c.l.b16 %v1017
          %v1089 = vunpack.c.l.b16 %v1018
          %v1090 = vunpack.c.l.b16 %v1019
          %v1091 = vunpack.c.l.b16 %v1020
          %v1092 = vunpack.c.l.b16 %v1021
          %v1093 = vunpack.c.l.b16 %v1022
          %v1094 = vunpack.c.l.b16 %v1023
          %v1095 = vunpack.c.l.b16 %v1024
          %v1096 = vunpack.c.l.b16 %v1025
          %v1097 = vunpack.c.l.b16 %v1026
          %v1098 = vunpack.c.l.b16 %v1027
          %v1099 = vunpack.c.l.b16 %v1028
          %v1100 = vunpack.c.l.b16 %v1029
          %v1101 = vunpack.c.l.b16 %v1030
          %v1102 = vunpack.c.l.b16 %v1031
          %v1103 = vunpack.c.l.b16 %v1032
          %v1104 = vpack.c.b16 %v1089, %v1088
          %v1105 = vpack.c.b16 %v1091, %v1090
          %v1106 = vpack.c.b16 %v1093, %v1092
          %v1107 = vpack.c.b16 %v1095, %v1094
          %v1108 = vpack.c.b16 %v1097, %v1096
          %v1109 = vpack.c.b16 %v1099, %v1098
          %v1110 = vpack.c.b16 %v1101, %v1100
          %v1111 = vpack.c.b16 %v1103, %v1102
          %1120 = vmatprep.subr.bf16.mxu0 0
          %1121 = vmatpush1.bf16.msra.mxu0 %v1104
          %1122 = vmatprep.subr.bf16.mxu0 0
          %1123 = vmatpush1.bf16.msra.mxu0 %v1105
          %1124 = vmatprep.subr.bf16.mxu0 0
          %1125 = vmatpush1.bf16.msra.mxu0 %v1106
          %1126 = vmatprep.subr.bf16.mxu0 0
          %1127 = vmatpush1.bf16.msra.mxu0 %v1107
          %1128 = vmatprep.subr.bf16.mxu0 0
          %1129 = vmatpush1.bf16.msra.mxu0 %v1108
          %1130 = vmatprep.subr.bf16.mxu0 0
          %1131 = vmatpush1.bf16.msra.mxu0 %v1109
          %1132 = vmatprep.subr.bf16.mxu0 0
          %1133 = vmatpush1.bf16.msra.mxu0 %v1110
          %1134 = vmatprep.subr.bf16.mxu0 0
          %1135 = vmatpush1.bf16.msra.mxu0 %v1111
          %1136 = vmatprep.subr.bf16.mxu0 0
          %1137 = vmatpush1.bf16.msra.mxu0 0
          %1138 = vmatprep.subr.bf16.mxu0 0
          %1139 = vmatpush1.bf16.msra.mxu0 0
          %1140 = vmatprep.subr.bf16.mxu0 0
          %1141 = vmatpush1.bf16.msra.mxu0 0
          %1142 = vmatprep.subr.bf16.mxu0 0
          %1143 = vmatpush1.bf16.msra.mxu0 0
          %1144 = vmatprep.subr.bf16.mxu0 0
          %1145 = vmatpush1.bf16.msra.mxu0 0
          %1146 = vmatprep.subr.bf16.mxu0 0
          %1147 = vmatpush1.bf16.msra.mxu0 0
          %1148 = vmatprep.subr.bf16.mxu0 0
          %1149 = vmatpush1.bf16.msra.mxu0 0
          %1150 = vmatprep.subr.bf16.mxu0 0
          %1151 = vmatpush1.bf16.msra.mxu0 0
          %1152 = vmatprep.mubr.bf16.mxu0 0
          %1153 = vmatmul.mubr.bf16.gmra.mrb[0].mxu0 %v1070
          %v1154 = vpop.f32.mrb[0].mxu0
          %v1155 = vadd.f32 %v1038, %v1154
          %v1156 = vpop.f32.mrb[0].mxu0
          %v1157 = vpop.f32.mrb[0].mxu0
          %v1158 = vpop.f32.mrb[0].mxu0
          %1159 = vdwg.mxu0
          %v1160 = vpack.c.bf16 %v926, %v926
          %v1161 = vld [vmem:[#allocation12] sm:$0xf]
          %v1162 = vld [vmem:[#allocation12 + $0x4] sm:$0xf]
          %v1163 = vld [vmem:[#allocation12 + $0x8] sm:$0xf]
          %v1164 = vld [vmem:[#allocation12 + $0xc] sm:$0xf]
          %v1165 = vld [vmem:[#allocation12 + $0x10] sm:$0xf]
          %v1166 = vld [vmem:[#allocation12 + $0x14] sm:$0xf]
          %v1167 = vld [vmem:[#allocation12 + $0x18] sm:$0xf]
          %v1168 = vld [vmem:[#allocation12 + $0x1c] sm:$0xf]
          %v1169 = vld [vmem:[#allocation12 + $0x20] sm:$0xf]
          %v1170 = vld [vmem:[#allocation12 + $0x24] sm:$0xf]
          %v1171 = vld [vmem:[#allocation12 + $0x28] sm:$0xf]
          %v1172 = vld [vmem:[#allocation12 + $0x2c] sm:$0xf]
          %v1173 = vld [vmem:[#allocation12 + $0x30] sm:$0xf]
          %v1174 = vld [vmem:[#allocation12 + $0x34] sm:$0xf]
          %v1175 = vld [vmem:[#allocation12 + $0x38] sm:$0xf]
          %v1176 = vld [vmem:[#allocation12 + $0x3c] sm:$0xf]
          %v1177 = vld [vmem:[%s8] sm:$0x1]
          %v1179 = vlaneseq
          %v1180 = vshrl.u32 %v1179, 7
          %v1181 = vsub.s32 0, %v1180
          %v1182 = vrot.slane %v1177, %v1181
          %v1200 = vunpack.c.l.b16 %v1161
          %v1201 = vunpack.c.l.b16 %v1162
          %v1202 = vunpack.c.l.b16 %v1163
          %v1203 = vunpack.c.l.b16 %v1164
          %v1204 = vunpack.c.l.b16 %v1165
          %v1205 = vunpack.c.l.b16 %v1166
          %v1206 = vunpack.c.l.b16 %v1167
          %v1207 = vunpack.c.l.b16 %v1168
          %v1208 = vunpack.c.l.b16 %v1169
          %v1209 = vunpack.c.l.b16 %v1170
          %v1210 = vunpack.c.l.b16 %v1171
          %v1211 = vunpack.c.l.b16 %v1172
          %v1212 = vunpack.c.l.b16 %v1173
          %v1213 = vunpack.c.l.b16 %v1174
          %v1214 = vunpack.c.l.b16 %v1175
          %v1215 = vunpack.c.l.b16 %v1176
          %v1216 = vpack.c.b16 %v1201, %v1200
          %v1217 = vpack.c.b16 %v1203, %v1202
          %v1218 = vpack.c.b16 %v1205, %v1204
          %v1219 = vpack.c.b16 %v1207, %v1206
          %v1220 = vpack.c.b16 %v1209, %v1208
          %v1221 = vpack.c.b16 %v1211, %v1210
          %v1222 = vpack.c.b16 %v1213, %v1212
          %v1223 = vpack.c.b16 %v1215, %v1214
          %1232 = vmatprep.subr.bf16.mxu0 0
          %1233 = vmatpush1.bf16.msra.mxu0 %v1216
          %1234 = vmatprep.subr.bf16.mxu0 0
          %1235 = vmatpush1.bf16.msra.mxu0 %v1217
          %1236 = vmatprep.subr.bf16.mxu0 0
          %1237 = vmatpush1.bf16.msra.mxu0 %v1218
          %1238 = vmatprep.subr.bf16.mxu0 0
          %1239 = vmatpush1.bf16.msra.mxu0 %v1219
          %1240 = vmatprep.subr.bf16.mxu0 0
          %1241 = vmatpush1.bf16.msra.mxu0 %v1220
          %1242 = vmatprep.subr.bf16.mxu0 0
          %1243 = vmatpush1.bf16.msra.mxu0 %v1221
          %1244 = vmatprep.subr.bf16.mxu0 0
          %1245 = vmatpush1.bf16.msra.mxu0 %v1222
          %1246 = vmatprep.subr.bf16.mxu0 0
          %1247 = vmatpush1.bf16.msra.mxu0 %v1223
          %1248 = vmatprep.subr.bf16.mxu0 0
          %1249 = vmatpush1.bf16.msra.mxu0 0
          %1250 = vmatprep.subr.bf16.mxu0 0
          %1251 = vmatpush1.bf16.msra.mxu0 0
          %1252 = vmatprep.subr.bf16.mxu0 0
          %1253 = vmatpush1.bf16.msra.mxu0 0
          %1254 = vmatprep.subr.bf16.mxu0 0
          %1255 = vmatpush1.bf16.msra.mxu0 0
          %1256 = vmatprep.subr.bf16.mxu0 0
          %1257 = vmatpush1.bf16.msra.mxu0 0
          %1258 = vmatprep.subr.bf16.mxu0 0
          %1259 = vmatpush1.bf16.msra.mxu0 0
          %1260 = vmatprep.subr.bf16.mxu0 0
          %1261 = vmatpush1.bf16.msra.mxu0 0
          %1262 = vmatprep.subr.bf16.mxu0 0
          %1263 = vmatpush1.bf16.msra.mxu0 0
          %1264 = vmatprep.mubr.bf16.mxu0 0
          %1265 = vmatmul.mubr.bf16.gmra.mrb[0].mxu0 %v1160
          %v1266 = vpop.f32.mrb[0].mxu0
          %v1267 = vadd.f32 %v1182, %v1266
          %v1268 = vpop.f32.mrb[0].mxu0
          %v1269 = vpop.f32.mrb[0].mxu0
          %v1270 = vpop.f32.mrb[0].mxu0
          %1271 = vdwg.mxu0
          %1272 = vst [vmem:[#allocation14] sm:$0xff] %v1267
          %v1273 = vmul.f32 %v926, %v926
          %1274 = vadd.xlane.f32.xlu0 %v1273
          %v1275 = vpop.xlane.xlu0 %1274
          %v1276 = vadd.f32 %v1275, 1e-12
          %v1277 = vrsqrt.pop %v1276
          %v1278 = vmul.f32 %v926, %v1277
          %v1279 = vmul.f32 %v1155, %v1155
          %1280 = vadd.xlane.f32.xlu0 %v1279
          %v1281 = vpop.xlane.xlu0 %1280
          %v1282 = vadd.f32 %v1281, 1e-12
          %v1283 = vrsqrt.pop %v1282
          %v1284 = vmul.f32 %v1155, %v1283
          %v1285 = vpack.c.bf16 %v1278, %v1278
          %v1286 = vpack.c.bf16 %v1284, %v1284
          %1287 = vmatprep.subr.bf16.mxu0 0
          %1288 = vmatpush1.bf16.xpose.msra.mxu0 %v1286
          %1289 = vmatprep.subr.bf16.mxu0 0
          %1290 = vmatpush1.bf16.xpose.msra.mxu0 0
          %1291 = vmatprep.subr.bf16.mxu0 0
          %1292 = vmatpush1.bf16.xpose.msra.mxu0 0
          %1293 = vmatprep.subr.bf16.mxu0 0
          %1294 = vmatpush1.bf16.xpose.msra.mxu0 0
          %1295 = vmatprep.subr.bf16.mxu0 0
          %1296 = vmatpush1.bf16.xpose.msra.mxu0 0
          %1297 = vmatprep.subr.bf16.mxu0 0
          %1298 = vmatpush1.bf16.xpose.msra.mxu0 0
          %1299 = vmatprep.subr.bf16.mxu0 0
          %1300 = vmatpush1.bf16.xpose.msra.mxu0 0
          %1301 = vmatprep.subr.bf16.mxu0 0
          %1302 = vmatpush1.bf16.xpose.msra.mxu0 0
          %1303 = vmatprep.subr.bf16.mxu0 0
          %1304 = vmatpush1.bf16.xpose.msra.mxu0 0
          %1305 = vmatprep.subr.bf16.mxu0 0
          %1306 = vmatpush1.bf16.xpose.msra.mxu0 0
          %1307 = vmatprep.subr.bf16.mxu0 0
          %1308 = vmatpush1.bf16.xpose.msra.mxu0 0
          %1309 = vmatprep.subr.bf16.mxu0 0
          %1310 = vmatpush1.bf16.xpose.msra.mxu0 0
          %1311 = vmatprep.subr.bf16.mxu0 0
          %1312 = vmatpush1.bf16.xpose.msra.mxu0 0
          %1313 = vmatprep.subr.bf16.mxu0 0
          %1314 = vmatpush1.bf16.xpose.msra.mxu0 0
          %1315 = vmatprep.subr.bf16.mxu0 0
          %1316 = vmatpush1.bf16.xpose.msra.mxu0 0
          %1317 = vmatprep.subr.bf16.mxu0 0
          %1318 = vmatpush1.bf16.xpose.msra.mxu0 0
          %1319 = vmatprep.mubr.bf16.mxu0 0
          %1320 = vmatmul.mubr.bf16.gmra.mrb[0].mxu0 %v1285
          %v1321 = vpop.f32.mrb[0].mxu0
          %v1322 = vadd.f32 0.0, %v1321
          %v1323 = vpop.f32.mrb[0].mxu0
          %v1324 = vpop.f32.mrb[0].mxu0
          %v1325 = vpop.f32.mrb[0].mxu0
          %1326 = vdwg.mxu0
          %v1327 = vmul.f32 %v1322, 14.285714
          %vm1328 = vcmask 64512
          %1329 = vst.msk [vmem:[#allocation15] sm:$0xff] %vm1328, %v1327
        $region88: #{tpu_custom_call.1} parent=55 // pred_fallthru
          _
        // Predicated region
        $region89: #{tpu_custom_call.1} parent=55 // pred_check
          %p1330 = pneg %p249
        $region90: #{tpu_custom_call.1} parent=55 // pred_check_branch
          %1332 = sbr.rel (%p1330) target = $region92
        $region91: #{tpu_custom_call.1} parent=55 // pred_region
          %s1334 = ssub.s32 128, 128
          %1335 = vsyncadd [#allocation5], %s1334
          %s1337 = sshll.u32 [#allocation14], 4
          %s1338 = int_to_ptr.vmem [resolvable:$true] %s1337
          %1340 = dma.vmem_to_hbm [thread:$0]  %s1338, 128, %s9, [#allocation5]
        $region92: #{tpu_custom_call.1} parent=55 // pred_fallthru
          _
        // Predicated region
        $region93: #{tpu_custom_call.1} parent=55 // pred_check
          %p1341 = pneg %p270
        $region94: #{tpu_custom_call.1} parent=55 // pred_check_branch
          %1343 = sbr.rel (%p1341) target = $region96
        $region95: #{tpu_custom_call.1} parent=55 // pred_region
          %s1345 = ssub.s32 128, 128
          %1346 = vsyncadd [#allocation16], %s1345
          %s1348 = sshll.u32 [#allocation15], 4
          %s1349 = int_to_ptr.vmem [resolvable:$true] %s1348
          %1351 = dma.vmem_to_hbm [thread:$0]  %s1349, 128, %s10, [#allocation16]
        $region96: #{tpu_custom_call.1} parent=55 // pred_fallthru
          _
        // Predicated region
        $region97: #{tpu_custom_call.1} parent=55 // pred_check
          %p1352 = pneg %p249
        $region98: #{tpu_custom_call.1} parent=55 // pred_check_branch
          %1354 = sbr.rel (%p1352) target = $region100
        $region99: #{tpu_custom_call.1} parent=55 // pred_region
          %1355 = dma.done [#allocation5], 128
        $region100: #{tpu_custom_call.1} parent=55 // pred_fallthru
          _
        // Predicated region
        $region101: #{tpu_custom_call.1} parent=55 // pred_check
          %p1356 = pneg %p270
        $region102: #{tpu_custom_call.1} parent=55 // pred_check_branch
          %1358 = sbr.rel (%p1356) target = $region104
        $region103: #{tpu_custom_call.1} parent=55 // pred_region
          %1359 = dma.done [#allocation16], 128
        $region104: #{tpu_custom_call.1} parent=55 // pred_fallthru
          _
      $region56: #{tpu_custom_call.1} parent=5 // pred_fallthru
        _
      %p1360 = scmp.le.s32.totalorder 2, %s27
      // Predicated region
      $region105: #{tpu_custom_call.1} parent=5 // pred_check
        %p1361 = pneg %p1360
      $region106: #{tpu_custom_call.1} parent=5 // pred_check_branch
        %1363 = sbr.rel (%p1361) target = $region108
      $region107: #{tpu_custom_call.1} parent=5 // pred_region
        %s1364 = ssub.s32 %s27, 2
      $region108: #{tpu_custom_call.1} parent=5 // pred_fallthru
        _
    $region6: #{tpu_custom_call.1} parent=1 // loop_footer
      %s31 = sadd.s32 1, %s27
    $region7: #{tpu_custom_call.1} parent=1 // loop_footer_branch
      %26 = sbr.rel target = $region3
    $region8: #{tpu_custom_call.1} parent=1 // loop_exit
      _
    %1365 = vsyncpa [#allocation4], 1
    %s1366 = scalar_lea.sflag [#allocation4], 1
    %1367 = vsyncpa %s1366, 1
    %1368 = vsyncpa [#allocation7], 1
    %s1369 = scalar_lea.sflag [#allocation7], 1
    %1370 = vsyncpa %s1369, 1
    %1371 = vsyncpa [#allocation10], 1
    %1372 = vsyncpa [#allocation13], 1
    %1373 = vsyncpa [#allocation5], 1
    %s1374 = scalar_lea.sflag [#allocation5], 1
    %1375 = vsyncpa %s1374, 1
    %1376 = vsyncpa [#allocation16], 1

</llo_original>
